<compile_context>
chip_gen: v7x
topology: tpu7x:2x2x1
jax: 0.10.0
libtpu: 0.0.40
codegen_flags: <defaults>
</compile_context>

<pallas_src>
import jax
import jax.numpy as jnp
from jax import lax
from jax.experimental import pallas as pl
from jax.experimental.pallas import tpu as pltpu

# Small, hardware-friendly shapes consistent with the module structure.
N_EMBD = 128          # module default is 384; kept lane-aligned and small
N_HEAD = 4
HEAD_SIZE = N_EMBD // N_HEAD
SEQ_LEN = 16          # T  (<= block_size)
BATCH = 2
LN_EPS = 1e-5


def _layernorm(x, gamma, beta):
    mu = jnp.mean(x, axis=-1, keepdims=True)
    var = jnp.mean((x - mu) ** 2, axis=-1, keepdims=True)
    return (x - mu) * jax.lax.rsqrt(var + LN_EPS) * gamma + beta


def block_kernel(x_ref, mask_ref, g1_ref, be1_ref,
                 wq_ref, wk_ref, wv_ref, wp_ref, bp_ref,
                 g2_ref, be2_ref,
                 w1_ref, bf1_ref, w2_ref, bf2_ref,
                 o_ref):
    B, T, E = x_ref.shape
    M = B * T
    hs = E // N_HEAD

    # Whole batch as one (B*T, E) slab -> bigger MXU row fill on every matmul.
    x = x_ref[...].reshape(M, E).astype(jnp.float32)

    # ---- LayerNorm 1 (f32) ----
    x1 = _layernorm(x, g1_ref[0], be1_ref[0])
    x1b = x1.astype(jnp.bfloat16)                           # bf16 MXU inputs

    # ---- QKV projections (bf16 x bf16 -> f32 accumulate) ----
    scale = E ** (-0.5)                                     # C ** -0.5, C = n_embd
    q = jnp.dot(x1b, wq_ref[...], preferred_element_type=jnp.float32) * scale
    k = jnp.dot(x1b, wk_ref[...], preferred_element_type=jnp.float32)
    v = jnp.dot(x1b, wv_ref[...], preferred_element_type=jnp.float32)

    # Block-diagonal causal mask over the flattened (B*T) axis, precomputed
    # in the wrapper and passed in as f32 (1.0 = attend, 0.0 = masked).
    allowed = mask_ref[...] > 0.0                           # (M, M) bool

    # Contract last dims directly (no explicit transpose of k).
    dn = (((1,), (1,)), ((), ()))

    sa = jnp.zeros((M, E), jnp.float32)
    for h in range(N_HEAD):                                 # static unroll over heads
        sl = slice(h * hs, (h + 1) * hs)
        qh = q[:, sl].astype(jnp.bfloat16)
        kh = k[:, sl].astype(jnp.bfloat16)
        vh = v[:, sl].astype(jnp.bfloat16)

        s = lax.dot_general(qh, kh, dn, preferred_element_type=jnp.float32)
        s = jnp.where(allowed, s, -jnp.inf)
        # numerically-stable softmax along keys (f32, EUP exp + approx recip)
        s = s - jnp.max(s, axis=-1, keepdims=True)
        p = jnp.exp(s)
        p = p * pl.reciprocal(jnp.sum(p, axis=-1, keepdims=True), approx=True)

        oh = jnp.dot(p.astype(jnp.bfloat16), vh,
                     preferred_element_type=jnp.float32)    # (M, hs)
        # Project through the h-th row-slab of Wproj and accumulate.
        # (== concat(head outs) @ Wproj, without the lane-concatenate relayout)
        sa = sa + jnp.dot(oh.astype(jnp.bfloat16), wp_ref[h * hs:(h + 1) * hs, :],
                          preferred_element_type=jnp.float32)

    sa = sa + bp_ref[0]                                     # proj bias (dropout = id)
    x = x + sa                                              # residual 1

    # ---- LayerNorm 2 + FeedForward: Linear -> ReLU -> Linear ----
    x2 = _layernorm(x, g2_ref[0], be2_ref[0]).astype(jnp.bfloat16)
    h1 = jnp.dot(x2, w1_ref[...], preferred_element_type=jnp.float32) + bf1_ref[0]
    h1 = jnp.maximum(h1, 0.0).astype(jnp.bfloat16)
    ff = jnp.dot(h1, w2_ref[...], preferred_element_type=jnp.float32) + bf2_ref[0]

    o_ref[...] = (x + ff).reshape(B, T, E).astype(o_ref.dtype)  # residual 2


def transformer_block(x, params):
    B, T, E = x.shape
    H = 4 * E
    M = B * T

    # Block-diagonal causal mask over the flattened (B*T) axis (host-side,
    # constant-folded by XLA): attend iff same batch element AND causal.
    ridx = jnp.arange(M)
    same_batch = (ridx[:, None] // T) == (ridx[None, :] // T)
    causal = ridx[:, None] >= ridx[None, :]
    mask = (same_batch & causal).astype(jnp.float32)

    def _full(shape):
        return pl.BlockSpec(shape, lambda i, s=shape: (0,) * len(s))

    in_specs = [
        pl.BlockSpec((B, T, E), lambda i: (0, 0, 0)),       # x (whole batch)
        _full((M, M)),                                      # attention mask
        _full((1, E)), _full((1, E)),                       # ln1 gamma/beta
        _full((E, E)), _full((E, E)), _full((E, E)),        # Wq, Wk, Wv (bf16)
        _full((E, E)), _full((1, E)),                       # Wproj (bf16), bproj
        _full((1, E)), _full((1, E)),                       # ln2 gamma/beta
        _full((E, H)), _full((1, H)),                       # W1 (bf16), b1
        _full((H, E)), _full((1, E)),                       # W2 (bf16), b2
    ]
    out_spec = pl.BlockSpec((B, T, E), lambda i: (0, 0, 0))

    return pl.pallas_call(
        block_kernel,
        out_shape=jax.ShapeDtypeStruct((B, T, E), x.dtype),
        grid_spec=pltpu.PrefetchScalarGridSpec(
            num_scalar_prefetch=0,
            grid=(1,),                                      # single step: whole block fits VMEM
            in_specs=in_specs,
            out_specs=out_spec,
        ),
        compiler_params=pltpu.CompilerParams(
            dimension_semantics=("arbitrary",)),
    )(x, mask, *params)


def init_params(key, n_embd=N_EMBD):
    E = n_embd
    H = 4 * E
    keys = jax.random.split(key, 10)
    s = 0.02
    bf16 = jnp.bfloat16
    # Weights stored as (in_features, out_features) so kernel does x @ W.
    # Matmul weights live in bf16 (halves HBM traffic, native MXU path);
    # biases and LayerNorm params stay in f32.
    wq = (s * jax.random.normal(keys[0], (E, E), jnp.float32)).astype(bf16)
    wk = (s * jax.random.normal(keys[1], (E, E), jnp.float32)).astype(bf16)
    wv = (s * jax.random.normal(keys[2], (E, E), jnp.float32)).astype(bf16)
    wp = (s * jax.random.normal(keys[3], (E, E), jnp.float32)).astype(bf16)
    bp = s * jax.random.normal(keys[4], (1, E), jnp.float32)
    w1 = (s * jax.random.normal(keys[5], (E, H), jnp.float32)).astype(bf16)
    b1 = s * jax.random.normal(keys[6], (1, H), jnp.float32)
    w2 = (s * jax.random.normal(keys[7], (H, E), jnp.float32)).astype(bf16)
    b2 = s * jax.random.normal(keys[8], (1, E), jnp.float32)
    g1 = jnp.ones((1, E), jnp.float32)
    be1 = jnp.zeros((1, E), jnp.float32)
    g2 = jnp.ones((1, E), jnp.float32)
    be2 = jnp.zeros((1, E), jnp.float32)
    return (g1, be1, wq, wk, wv, wp, bp, g2, be2, w1, b1, w2, b2)


def reference_block(x, params):
    """Pure-JAX reference (eval mode: dropout = identity), per-batch/per-head
    formulation with the same bf16-weight / f32-accumulate numerics."""
    g1, be1, wq, wk, wv, wp, bp, g2, be2, w1, b1, w2, b2 = params
    B, T, E = x.shape
    hs = E // N_HEAD
    f32 = jnp.float32
    bf16 = jnp.bfloat16

    x = x.astype(f32)
    x1 = _layernorm(x, g1[0], be1[0]).astype(bf16)
    q = jnp.einsum("bte,ef->btf", x1, wq, preferred_element_type=f32) * (E ** -0.5)
    k = jnp.einsum("bte,ef->btf", x1, wk, preferred_element_type=f32)
    v = jnp.einsum("bte,ef->btf", x1, wv, preferred_element_type=f32)

    qh = q.reshape(B, T, N_HEAD, hs).transpose(0, 2, 1, 3).astype(bf16)
    kh = k.reshape(B, T, N_HEAD, hs).transpose(0, 2, 1, 3).astype(bf16)
    vh = v.reshape(B, T, N_HEAD, hs).transpose(0, 2, 1, 3).astype(bf16)

    s = jnp.einsum("bhqd,bhkd->bhqk", qh, kh, preferred_element_type=f32)
    tril = jnp.tril(jnp.ones((T, T), bool))
    s = jnp.where(tril, s, -jnp.inf)
    p = jax.nn.softmax(s, axis=-1).astype(bf16)
    o = jnp.einsum("bhqk,bhkd->bhqd", p, vh, preferred_element_type=f32)
    o = o.transpose(0, 2, 1, 3).reshape(B, T, E)

    sa = jnp.einsum("bte,ef->btf", o.astype(bf16), wp,
                    preferred_element_type=f32) + bp[0]
    x = x + sa

    x2 = _layernorm(x, g2[0], be2[0]).astype(bf16)
    h1 = jnp.einsum("bte,ef->btf", x2, w1, preferred_element_type=f32) + b1[0]
    h1 = jnp.maximum(h1, 0.0).astype(bf16)
    ff = jnp.einsum("btf,fe->bte", h1, w2, preferred_element_type=f32) + b2[0]
    return x + ff


if __name__ == "__main__":
    key = jax.random.PRNGKey(0)
    kx, kp = jax.random.split(key)
    x = jax.random.normal(kx, (BATCH, SEQ_LEN, N_EMBD), jnp.float32)
    params = init_params(kp)

    out = transformer_block(x, params)
    out = jax.block_until_ready(out)

    ref = reference_block(x, params)
    assert out.shape == (BATCH, SEQ_LEN, N_EMBD)
    assert jnp.all(jnp.isfinite(out)), "non-finite values in kernel output"
    assert jnp.allclose(out, ref, atol=5e-3, rtol=5e-3), "mismatch vs reference"

    print("KERNEL_OK")
</pallas_src>

<mosaic_0001>
module attributes {stable_mosaic.version = 11 : i64} {
  func.func @block_kernel(%arg0: i32, %arg1: memref<2x16x128xf32, #tpu.memory_space<vmem>>, %arg2: memref<32x32xf32, #tpu.memory_space<vmem>>, %arg3: memref<1x128xf32, #tpu.memory_space<vmem>>, %arg4: memref<1x128xf32, #tpu.memory_space<vmem>>, %arg5: memref<128x128xbf16, #tpu.memory_space<vmem>>, %arg6: memref<128x128xbf16, #tpu.memory_space<vmem>>, %arg7: memref<128x128xbf16, #tpu.memory_space<vmem>>, %arg8: memref<128x128xbf16, #tpu.memory_space<vmem>>, %arg9: memref<1x128xf32, #tpu.memory_space<vmem>>, %arg10: memref<1x128xf32, #tpu.memory_space<vmem>>, %arg11: memref<1x128xf32, #tpu.memory_space<vmem>>, %arg12: memref<128x512xbf16, #tpu.memory_space<vmem>>, %arg13: memref<1x512xf32, #tpu.memory_space<vmem>>, %arg14: memref<512x128xbf16, #tpu.memory_space<vmem>>, %arg15: memref<1x128xf32, #tpu.memory_space<vmem>>, %arg16: memref<2x16x128xf32, #tpu.memory_space<vmem>>) attributes {dimension_semantics = [#tpu.dimension_semantics<arbitrary>], iteration_bounds = array<i64: 1>, scalar_prefetch = 0 : i64, scratch_operands = 0 : i64, tpu.core_type = #tpu.core_type<tc>, window_params = [{pipeline_mode = #tpu.pipeline_mode<synchronous>, transform_indices = @transform_0, window_bounds = array<i64: 2, 16, 128>}, {pipeline_mode = #tpu.pipeline_mode<synchronous>, transform_indices = @transform_1, window_bounds = array<i64: 32, 32>}, {pipeline_mode = #tpu.pipeline_mode<synchronous>, transform_indices = @transform_2, window_bounds = array<i64: 1, 128>}, {pipeline_mode = #tpu.pipeline_mode<synchronous>, transform_indices = @transform_3, window_bounds = array<i64: 1, 128>}, {pipeline_mode = #tpu.pipeline_mode<synchronous>, transform_indices = @transform_4, window_bounds = array<i64: 128, 128>}, {pipeline_mode = #tpu.pipeline_mode<synchronous>, transform_indices = @transform_5, window_bounds = array<i64: 128, 128>}, {pipeline_mode = #tpu.pipeline_mode<synchronous>, transform_indices = @transform_6, window_bounds = array<i64: 128, 128>}, {pipeline_mode = #tpu.pipeline_mode<synchronous>, transform_indices = @transform_7, window_bounds = array<i64: 128, 128>}, {pipeline_mode = #tpu.pipeline_mode<synchronous>, transform_indices = @transform_8, window_bounds = array<i64: 1, 128>}, {pipeline_mode = #tpu.pipeline_mode<synchronous>, transform_indices = @transform_9, window_bounds = array<i64: 1, 128>}, {pipeline_mode = #tpu.pipeline_mode<synchronous>, transform_indices = @transform_10, window_bounds = array<i64: 1, 128>}, {pipeline_mode = #tpu.pipeline_mode<synchronous>, transform_indices = @transform_11, window_bounds = array<i64: 128, 512>}, {pipeline_mode = #tpu.pipeline_mode<synchronous>, transform_indices = @transform_12, window_bounds = array<i64: 1, 512>}, {pipeline_mode = #tpu.pipeline_mode<synchronous>, transform_indices = @transform_13, window_bounds = array<i64: 512, 128>}, {pipeline_mode = #tpu.pipeline_mode<synchronous>, transform_indices = @transform_14, window_bounds = array<i64: 1, 128>}, {pipeline_mode = #tpu.pipeline_mode<synchronous>, transform_indices = @transform_15, window_bounds = array<i64: 2, 16, 128>}]} {
    %c0 = arith.constant 0 : index
    %c0_0 = arith.constant 0 : index
    %c0_1 = arith.constant 0 : index
    %0 = vector.load %arg1[%c0, %c0_0, %c0_1] : memref<2x16x128xf32, #tpu.memory_space<vmem>>, vector<2x16x128xf32>
    %1 = vector.shape_cast %0 : vector<2x16x128xf32> to vector<32x128xf32>
    %c0_2 = arith.constant 0 : index
    %c0_3 = arith.constant 0 : index
    %2 = vector.load %arg3[%c0_2, %c0_3] : memref<1x128xf32, #tpu.memory_space<vmem>>, vector<1x128xf32>
    %3 = vector.shape_cast %2 : vector<1x128xf32> to vector<128xf32>
    %c0_4 = arith.constant 0 : index
    %c0_5 = arith.constant 0 : index
    %4 = vector.load %arg4[%c0_4, %c0_5] : memref<1x128xf32, #tpu.memory_space<vmem>>, vector<1x128xf32>
    %5 = vector.shape_cast %4 : vector<1x128xf32> to vector<128xf32>
    %cst = arith.constant dense<0.000000e+00> : vector<32xf32>
    %6 = vector.multi_reduction <add>, %1, %cst [1] : vector<32x128xf32> to vector<32xf32>
    %7 = vector.shape_cast %6 : vector<32xf32> to vector<32x1xf32>
    %cst_6 = arith.constant 1.280000e+02 : f32
    %8 = vector.broadcast %cst_6 : f32 to vector<32x1xf32>
    %9 = arith.divf %7, %8 : vector<32x1xf32>
    %10 = vector.broadcast %9 : vector<32x1xf32> to vector<32x128xf32>
    %11 = arith.subf %1, %10 : vector<32x128xf32>
    %12 = arith.mulf %11, %11 : vector<32x128xf32>
    %cst_7 = arith.constant dense<0.000000e+00> : vector<32xf32>
    %13 = vector.multi_reduction <add>, %12, %cst_7 [1] : vector<32x128xf32> to vector<32xf32>
    %14 = vector.shape_cast %13 : vector<32xf32> to vector<32x1xf32>
    %cst_8 = arith.constant 1.280000e+02 : f32
    %15 = vector.broadcast %cst_8 : f32 to vector<32x1xf32>
    %16 = arith.divf %14, %15 : vector<32x1xf32>
    %17 = vector.broadcast %9 : vector<32x1xf32> to vector<32x128xf32>
    %18 = arith.subf %1, %17 : vector<32x128xf32>
    %cst_9 = arith.constant 9.99999974E-6 : f32
    %19 = vector.broadcast %cst_9 : f32 to vector<32x1xf32>
    %20 = arith.addf %16, %19 : vector<32x1xf32>
    %21 = math.rsqrt %20 : vector<32x1xf32>
    %22 = vector.broadcast %21 : vector<32x1xf32> to vector<32x128xf32>
    %23 = arith.mulf %18, %22 : vector<32x128xf32>
    %24 = vector.shape_cast %3 : vector<128xf32> to vector<1x128xf32>
    %25 = vector.broadcast %24 : vector<1x128xf32> to vector<32x128xf32>
    %26 = arith.mulf %23, %25 : vector<32x128xf32>
    %27 = vector.shape_cast %5 : vector<128xf32> to vector<1x128xf32>
    %28 = vector.broadcast %27 : vector<1x128xf32> to vector<32x128xf32>
    %29 = arith.addf %26, %28 : vector<32x128xf32>
    %30 = arith.truncf %29 : vector<32x128xf32> to vector<32x128xbf16>
    %c0_10 = arith.constant 0 : index
    %c0_11 = arith.constant 0 : index
    %31 = vector.load %arg5[%c0_10, %c0_11] : memref<128x128xbf16, #tpu.memory_space<vmem>>, vector<128x128xbf16>
    %cst_12 = arith.constant dense<0.000000e+00> : vector<32x128xf32>
    %32 = tpu.matmul %30, %31, %cst_12 {dimension_numbers = #tpu.dot_dimension_numbers<[1], [0], [0], [1], [0, 0, 1, 1], [], []>} : vector<32x128xbf16>, vector<128x128xbf16>, vector<32x128xf32> -> vector<32x128xf32>
    %cst_13 = arith.constant 0.0883883461 : f32
    %33 = vector.broadcast %cst_13 : f32 to vector<32x128xf32>
    %34 = arith.mulf %32, %33 : vector<32x128xf32>
    %c0_14 = arith.constant 0 : index
    %c0_15 = arith.constant 0 : index
    %35 = vector.load %arg6[%c0_14, %c0_15] : memref<128x128xbf16, #tpu.memory_space<vmem>>, vector<128x128xbf16>
    %cst_16 = arith.constant dense<0.000000e+00> : vector<32x128xf32>
    %36 = tpu.matmul %30, %35, %cst_16 {dimension_numbers = #tpu.dot_dimension_numbers<[1], [0], [0], [1], [0, 0, 1, 1], [], []>} : vector<32x128xbf16>, vector<128x128xbf16>, vector<32x128xf32> -> vector<32x128xf32>
    %c0_17 = arith.constant 0 : index
    %c0_18 = arith.constant 0 : index
    %37 = vector.load %arg7[%c0_17, %c0_18] : memref<128x128xbf16, #tpu.memory_space<vmem>>, vector<128x128xbf16>
    %cst_19 = arith.constant dense<0.000000e+00> : vector<32x128xf32>
    %38 = tpu.matmul %30, %37, %cst_19 {dimension_numbers = #tpu.dot_dimension_numbers<[1], [0], [0], [1], [0, 0, 1, 1], [], []>} : vector<32x128xbf16>, vector<128x128xbf16>, vector<32x128xf32> -> vector<32x128xf32>
    %c0_20 = arith.constant 0 : index
    %c0_21 = arith.constant 0 : index
    %39 = vector.load %arg2[%c0_20, %c0_21] : memref<32x32xf32, #tpu.memory_space<vmem>>, vector<32x32xf32>
    %cst_22 = arith.constant 0.000000e+00 : f32
    %40 = vector.broadcast %cst_22 : f32 to vector<32x32xf32>
    %41 = arith.cmpf ogt, %39, %40 : vector<32x32xf32>
    %cst_23 = arith.constant 0.000000e+00 : f32
    %42 = vector.broadcast %cst_23 : f32 to vector<32x128xf32>
    %43 = vector.extract_strided_slice %34 {offsets = [0, 0], sizes = [32, 32], strides = [1, 1]} : vector<32x128xf32> to vector<32x32xf32>
    %44 = arith.truncf %43 : vector<32x32xf32> to vector<32x32xbf16>
    %45 = vector.extract_strided_slice %36 {offsets = [0, 0], sizes = [32, 32], strides = [1, 1]} : vector<32x128xf32> to vector<32x32xf32>
    %46 = arith.truncf %45 : vector<32x32xf32> to vector<32x32xbf16>
    %47 = vector.extract_strided_slice %38 {offsets = [0, 0], sizes = [32, 32], strides = [1, 1]} : vector<32x128xf32> to vector<32x32xf32>
    %48 = arith.truncf %47 : vector<32x32xf32> to vector<32x32xbf16>
    %cst_24 = arith.constant dense<0.000000e+00> : vector<32x32xf32>
    %49 = tpu.matmul %44, %46, %cst_24 {dimension_numbers = #tpu.dot_dimension_numbers<[1], [1], [0], [0], [0, 0, 1, 0], [], []>} : vector<32x32xbf16>, vector<32x32xbf16>, vector<32x32xf32> -> vector<32x32xf32>
    %cst_25 = arith.constant 0xFF800000 : f32
    %50 = vector.broadcast %cst_25 : f32 to vector<32x32xf32>
    %51 = arith.select %41, %49, %50 : vector<32x32xi1>, vector<32x32xf32>
    %cst_26 = arith.constant dense<0xFF800000> : vector<32xf32>
    %52 = vector.multi_reduction <maximumf>, %51, %cst_26 [1] : vector<32x32xf32> to vector<32xf32>
    %53 = vector.shape_cast %52 : vector<32xf32> to vector<32x1xf32>
    %54 = vector.broadcast %53 : vector<32x1xf32> to vector<32x32xf32>
    %55 = arith.subf %51, %54 : vector<32x32xf32>
    %56 = math.exp %55 : vector<32x32xf32>
    %cst_27 = arith.constant dense<0.000000e+00> : vector<32xf32>
    %57 = vector.multi_reduction <add>, %56, %cst_27 [1] : vector<32x32xf32> to vector<32xf32>
    %58 = vector.shape_cast %57 : vector<32xf32> to vector<32x1xf32>
    %59 = tpu.reciprocal %58 {approx = true} : vector<32x1xf32> -> vector<32x1xf32>
    %60 = vector.broadcast %59 : vector<32x1xf32> to vector<32x32xf32>
    %61 = arith.mulf %56, %60 : vector<32x32xf32>
    %62 = arith.truncf %61 : vector<32x32xf32> to vector<32x32xbf16>
    %cst_28 = arith.constant dense<0.000000e+00> : vector<32x32xf32>
    %63 = tpu.matmul %62, %48, %cst_28 {dimension_numbers = #tpu.dot_dimension_numbers<[1], [0], [0], [1], [0, 0, 1, 1], [], []>} : vector<32x32xbf16>, vector<32x32xbf16>, vector<32x32xf32> -> vector<32x32xf32>
    %64 = arith.truncf %63 : vector<32x32xf32> to vector<32x32xbf16>
    %c0_29 = arith.constant 0 : index
    %c0_30 = arith.constant 0 : index
    %65 = vector.load %arg8[%c0_29, %c0_30] : memref<128x128xbf16, #tpu.memory_space<vmem>>, vector<32x128xbf16>
    %cst_31 = arith.constant dense<0.000000e+00> : vector<32x128xf32>
    %66 = tpu.matmul %64, %65, %cst_31 {dimension_numbers = #tpu.dot_dimension_numbers<[1], [0], [0], [1], [0, 0, 1, 1], [], []>} : vector<32x32xbf16>, vector<32x128xbf16>, vector<32x128xf32> -> vector<32x128xf32>
    %67 = arith.addf %42, %66 : vector<32x128xf32>
    %68 = vector.extract_strided_slice %34 {offsets = [0, 32], sizes = [32, 32], strides = [1, 1]} : vector<32x128xf32> to vector<32x32xf32>
    %69 = arith.truncf %68 : vector<32x32xf32> to vector<32x32xbf16>
    %70 = vector.extract_strided_slice %36 {offsets = [0, 32], sizes = [32, 32], strides = [1, 1]} : vector<32x128xf32> to vector<32x32xf32>
    %71 = arith.truncf %70 : vector<32x32xf32> to vector<32x32xbf16>
    %72 = vector.extract_strided_slice %38 {offsets = [0, 32], sizes = [32, 32], strides = [1, 1]} : vector<32x128xf32> to vector<32x32xf32>
    %73 = arith.truncf %72 : vector<32x32xf32> to vector<32x32xbf16>
    %cst_32 = arith.constant dense<0.000000e+00> : vector<32x32xf32>
    %74 = tpu.matmul %69, %71, %cst_32 {dimension_numbers = #tpu.dot_dimension_numbers<[1], [1], [0], [0], [0, 0, 1, 0], [], []>} : vector<32x32xbf16>, vector<32x32xbf16>, vector<32x32xf32> -> vector<32x32xf32>
    %cst_33 = arith.constant 0xFF800000 : f32
    %75 = vector.broadcast %cst_33 : f32 to vector<32x32xf32>
    %76 = arith.select %41, %74, %75 : vector<32x32xi1>, vector<32x32xf32>
    %cst_34 = arith.constant dense<0xFF800000> : vector<32xf32>
    %77 = vector.multi_reduction <maximumf>, %76, %cst_34 [1] : vector<32x32xf32> to vector<32xf32>
    %78 = vector.shape_cast %77 : vector<32xf32> to vector<32x1xf32>
    %79 = vector.broadcast %78 : vector<32x1xf32> to vector<32x32xf32>
    %80 = arith.subf %76, %79 : vector<32x32xf32>
    %81 = math.exp %80 : vector<32x32xf32>
    %cst_35 = arith.constant dense<0.000000e+00> : vector<32xf32>
    %82 = vector.multi_reduction <add>, %81, %cst_35 [1] : vector<32x32xf32> to vector<32xf32>
    %83 = vector.shape_cast %82 : vector<32xf32> to vector<32x1xf32>
    %84 = tpu.reciprocal %83 {approx = true} : vector<32x1xf32> -> vector<32x1xf32>
    %85 = vector.broadcast %84 : vector<32x1xf32> to vector<32x32xf32>
    %86 = arith.mulf %81, %85 : vector<32x32xf32>
    %87 = arith.truncf %86 : vector<32x32xf32> to vector<32x32xbf16>
    %cst_36 = arith.constant dense<0.000000e+00> : vector<32x32xf32>
    %88 = tpu.matmul %87, %73, %cst_36 {dimension_numbers = #tpu.dot_dimension_numbers<[1], [0], [0], [1], [0, 0, 1, 1], [], []>} : vector<32x32xbf16>, vector<32x32xbf16>, vector<32x32xf32> -> vector<32x32xf32>
    %89 = arith.truncf %88 : vector<32x32xf32> to vector<32x32xbf16>
    %c32 = arith.constant 32 : index
    %c0_37 = arith.constant 0 : index
    %90 = vector.load %arg8[%c32, %c0_37] : memref<128x128xbf16, #tpu.memory_space<vmem>>, vector<32x128xbf16>
    %cst_38 = arith.constant dense<0.000000e+00> : vector<32x128xf32>
    %91 = tpu.matmul %89, %90, %cst_38 {dimension_numbers = #tpu.dot_dimension_numbers<[1], [0], [0], [1], [0, 0, 1, 1], [], []>} : vector<32x32xbf16>, vector<32x128xbf16>, vector<32x128xf32> -> vector<32x128xf32>
    %92 = arith.addf %67, %91 : vector<32x128xf32>
    %93 = vector.extract_strided_slice %34 {offsets = [0, 64], sizes = [32, 32], strides = [1, 1]} : vector<32x128xf32> to vector<32x32xf32>
    %94 = arith.truncf %93 : vector<32x32xf32> to vector<32x32xbf16>
    %95 = vector.extract_strided_slice %36 {offsets = [0, 64], sizes = [32, 32], strides = [1, 1]} : vector<32x128xf32> to vector<32x32xf32>
    %96 = arith.truncf %95 : vector<32x32xf32> to vector<32x32xbf16>
    %97 = vector.extract_strided_slice %38 {offsets = [0, 64], sizes = [32, 32], strides = [1, 1]} : vector<32x128xf32> to vector<32x32xf32>
    %98 = arith.truncf %97 : vector<32x32xf32> to vector<32x32xbf16>
    %cst_39 = arith.constant dense<0.000000e+00> : vector<32x32xf32>
    %99 = tpu.matmul %94, %96, %cst_39 {dimension_numbers = #tpu.dot_dimension_numbers<[1], [1], [0], [0], [0, 0, 1, 0], [], []>} : vector<32x32xbf16>, vector<32x32xbf16>, vector<32x32xf32> -> vector<32x32xf32>
    %cst_40 = arith.constant 0xFF800000 : f32
    %100 = vector.broadcast %cst_40 : f32 to vector<32x32xf32>
    %101 = arith.select %41, %99, %100 : vector<32x32xi1>, vector<32x32xf32>
    %cst_41 = arith.constant dense<0xFF800000> : vector<32xf32>
    %102 = vector.multi_reduction <maximumf>, %101, %cst_41 [1] : vector<32x32xf32> to vector<32xf32>
    %103 = vector.shape_cast %102 : vector<32xf32> to vector<32x1xf32>
    %104 = vector.broadcast %103 : vector<32x1xf32> to vector<32x32xf32>
    %105 = arith.subf %101, %104 : vector<32x32xf32>
    %106 = math.exp %105 : vector<32x32xf32>
    %cst_42 = arith.constant dense<0.000000e+00> : vector<32xf32>
    %107 = vector.multi_reduction <add>, %106, %cst_42 [1] : vector<32x32xf32> to vector<32xf32>
    %108 = vector.shape_cast %107 : vector<32xf32> to vector<32x1xf32>
    %109 = tpu.reciprocal %108 {approx = true} : vector<32x1xf32> -> vector<32x1xf32>
    %110 = vector.broadcast %109 : vector<32x1xf32> to vector<32x32xf32>
    %111 = arith.mulf %106, %110 : vector<32x32xf32>
    %112 = arith.truncf %111 : vector<32x32xf32> to vector<32x32xbf16>
    %cst_43 = arith.constant dense<0.000000e+00> : vector<32x32xf32>
    %113 = tpu.matmul %112, %98, %cst_43 {dimension_numbers = #tpu.dot_dimension_numbers<[1], [0], [0], [1], [0, 0, 1, 1], [], []>} : vector<32x32xbf16>, vector<32x32xbf16>, vector<32x32xf32> -> vector<32x32xf32>
    %114 = arith.truncf %113 : vector<32x32xf32> to vector<32x32xbf16>
    %c64 = arith.constant 64 : index
    %c0_44 = arith.constant 0 : index
    %115 = vector.load %arg8[%c64, %c0_44] : memref<128x128xbf16, #tpu.memory_space<vmem>>, vector<32x128xbf16>
    %cst_45 = arith.constant dense<0.000000e+00> : vector<32x128xf32>
    %116 = tpu.matmul %114, %115, %cst_45 {dimension_numbers = #tpu.dot_dimension_numbers<[1], [0], [0], [1], [0, 0, 1, 1], [], []>} : vector<32x32xbf16>, vector<32x128xbf16>, vector<32x128xf32> -> vector<32x128xf32>
    %117 = arith.addf %92, %116 : vector<32x128xf32>
    %118 = vector.extract_strided_slice %34 {offsets = [0, 96], sizes = [32, 32], strides = [1, 1]} : vector<32x128xf32> to vector<32x32xf32>
    %119 = arith.truncf %118 : vector<32x32xf32> to vector<32x32xbf16>
    %120 = vector.extract_strided_slice %36 {offsets = [0, 96], sizes = [32, 32], strides = [1, 1]} : vector<32x128xf32> to vector<32x32xf32>
    %121 = arith.truncf %120 : vector<32x32xf32> to vector<32x32xbf16>
    %122 = vector.extract_strided_slice %38 {offsets = [0, 96], sizes = [32, 32], strides = [1, 1]} : vector<32x128xf32> to vector<32x32xf32>
    %123 = arith.truncf %122 : vector<32x32xf32> to vector<32x32xbf16>
    %cst_46 = arith.constant dense<0.000000e+00> : vector<32x32xf32>
    %124 = tpu.matmul %119, %121, %cst_46 {dimension_numbers = #tpu.dot_dimension_numbers<[1], [1], [0], [0], [0, 0, 1, 0], [], []>} : vector<32x32xbf16>, vector<32x32xbf16>, vector<32x32xf32> -> vector<32x32xf32>
    %cst_47 = arith.constant 0xFF800000 : f32
    %125 = vector.broadcast %cst_47 : f32 to vector<32x32xf32>
    %126 = arith.select %41, %124, %125 : vector<32x32xi1>, vector<32x32xf32>
    %cst_48 = arith.constant dense<0xFF800000> : vector<32xf32>
    %127 = vector.multi_reduction <maximumf>, %126, %cst_48 [1] : vector<32x32xf32> to vector<32xf32>
    %128 = vector.shape_cast %127 : vector<32xf32> to vector<32x1xf32>
    %129 = vector.broadcast %128 : vector<32x1xf32> to vector<32x32xf32>
    %130 = arith.subf %126, %129 : vector<32x32xf32>
    %131 = math.exp %130 : vector<32x32xf32>
    %cst_49 = arith.constant dense<0.000000e+00> : vector<32xf32>
    %132 = vector.multi_reduction <add>, %131, %cst_49 [1] : vector<32x32xf32> to vector<32xf32>
    %133 = vector.shape_cast %132 : vector<32xf32> to vector<32x1xf32>
    %134 = tpu.reciprocal %133 {approx = true} : vector<32x1xf32> -> vector<32x1xf32>
    %135 = vector.broadcast %134 : vector<32x1xf32> to vector<32x32xf32>
    %136 = arith.mulf %131, %135 : vector<32x32xf32>
    %137 = arith.truncf %136 : vector<32x32xf32> to vector<32x32xbf16>
    %cst_50 = arith.constant dense<0.000000e+00> : vector<32x32xf32>
    %138 = tpu.matmul %137, %123, %cst_50 {dimension_numbers = #tpu.dot_dimension_numbers<[1], [0], [0], [1], [0, 0, 1, 1], [], []>} : vector<32x32xbf16>, vector<32x32xbf16>, vector<32x32xf32> -> vector<32x32xf32>
    %139 = arith.truncf %138 : vector<32x32xf32> to vector<32x32xbf16>
    %c96 = arith.constant 96 : index
    %c0_51 = arith.constant 0 : index
    %140 = vector.load %arg8[%c96, %c0_51] : memref<128x128xbf16, #tpu.memory_space<vmem>>, vector<32x128xbf16>
    %cst_52 = arith.constant dense<0.000000e+00> : vector<32x128xf32>
    %141 = tpu.matmul %139, %140, %cst_52 {dimension_numbers = #tpu.dot_dimension_numbers<[1], [0], [0], [1], [0, 0, 1, 1], [], []>} : vector<32x32xbf16>, vector<32x128xbf16>, vector<32x128xf32> -> vector<32x128xf32>
    %142 = arith.addf %117, %141 : vector<32x128xf32>
    %c0_53 = arith.constant 0 : index
    %c0_54 = arith.constant 0 : index
    %143 = vector.load %arg9[%c0_53, %c0_54] : memref<1x128xf32, #tpu.memory_space<vmem>>, vector<1x128xf32>
    %144 = vector.shape_cast %143 : vector<1x128xf32> to vector<128xf32>
    %145 = vector.shape_cast %144 : vector<128xf32> to vector<1x128xf32>
    %146 = vector.broadcast %145 : vector<1x128xf32> to vector<32x128xf32>
    %147 = arith.addf %142, %146 : vector<32x128xf32>
    %148 = arith.addf %1, %147 : vector<32x128xf32>
    %c0_55 = arith.constant 0 : index
    %c0_56 = arith.constant 0 : index
    %149 = vector.load %arg10[%c0_55, %c0_56] : memref<1x128xf32, #tpu.memory_space<vmem>>, vector<1x128xf32>
    %150 = vector.shape_cast %149 : vector<1x128xf32> to vector<128xf32>
    %c0_57 = arith.constant 0 : index
    %c0_58 = arith.constant 0 : index
    %151 = vector.load %arg11[%c0_57, %c0_58] : memref<1x128xf32, #tpu.memory_space<vmem>>, vector<1x128xf32>
    %152 = vector.shape_cast %151 : vector<1x128xf32> to vector<128xf32>
    %cst_59 = arith.constant dense<0.000000e+00> : vector<32xf32>
    %153 = vector.multi_reduction <add>, %148, %cst_59 [1] : vector<32x128xf32> to vector<32xf32>
    %154 = vector.shape_cast %153 : vector<32xf32> to vector<32x1xf32>
    %cst_60 = arith.constant 1.280000e+02 : f32
    %155 = vector.broadcast %cst_60 : f32 to vector<32x1xf32>
    %156 = arith.divf %154, %155 : vector<32x1xf32>
    %157 = vector.broadcast %156 : vector<32x1xf32> to vector<32x128xf32>
    %158 = arith.subf %148, %157 : vector<32x128xf32>
    %159 = arith.mulf %158, %158 : vector<32x128xf32>
    %cst_61 = arith.constant dense<0.000000e+00> : vector<32xf32>
    %160 = vector.multi_reduction <add>, %159, %cst_61 [1] : vector<32x128xf32> to vector<32xf32>
    %161 = vector.shape_cast %160 : vector<32xf32> to vector<32x1xf32>
    %cst_62 = arith.constant 1.280000e+02 : f32
    %162 = vector.broadcast %cst_62 : f32 to vector<32x1xf32>
    %163 = arith.divf %161, %162 : vector<32x1xf32>
    %164 = vector.broadcast %156 : vector<32x1xf32> to vector<32x128xf32>
    %165 = arith.subf %148, %164 : vector<32x128xf32>
    %cst_63 = arith.constant 9.99999974E-6 : f32
    %166 = vector.broadcast %cst_63 : f32 to vector<32x1xf32>
    %167 = arith.addf %163, %166 : vector<32x1xf32>
    %168 = math.rsqrt %167 : vector<32x1xf32>
    %169 = vector.broadcast %168 : vector<32x1xf32> to vector<32x128xf32>
    %170 = arith.mulf %165, %169 : vector<32x128xf32>
    %171 = vector.shape_cast %150 : vector<128xf32> to vector<1x128xf32>
    %172 = vector.broadcast %171 : vector<1x128xf32> to vector<32x128xf32>
    %173 = arith.mulf %170, %172 : vector<32x128xf32>
    %174 = vector.shape_cast %152 : vector<128xf32> to vector<1x128xf32>
    %175 = vector.broadcast %174 : vector<1x128xf32> to vector<32x128xf32>
    %176 = arith.addf %173, %175 : vector<32x128xf32>
    %177 = arith.truncf %176 : vector<32x128xf32> to vector<32x128xbf16>
    %c0_64 = arith.constant 0 : index
    %c0_65 = arith.constant 0 : index
    %178 = vector.load %arg12[%c0_64, %c0_65] : memref<128x512xbf16, #tpu.memory_space<vmem>>, vector<128x512xbf16>
    %cst_66 = arith.constant dense<0.000000e+00> : vector<32x512xf32>
    %179 = tpu.matmul %177, %178, %cst_66 {dimension_numbers = #tpu.dot_dimension_numbers<[1], [0], [0], [1], [0, 0, 1, 1], [], []>} : vector<32x128xbf16>, vector<128x512xbf16>, vector<32x512xf32> -> vector<32x512xf32>
    %c0_67 = arith.constant 0 : index
    %c0_68 = arith.constant 0 : index
    %180 = vector.load %arg13[%c0_67, %c0_68] : memref<1x512xf32, #tpu.memory_space<vmem>>, vector<1x512xf32>
    %181 = vector.shape_cast %180 : vector<1x512xf32> to vector<512xf32>
    %182 = vector.shape_cast %181 : vector<512xf32> to vector<1x512xf32>
    %183 = vector.broadcast %182 : vector<1x512xf32> to vector<32x512xf32>
    %184 = arith.addf %179, %183 : vector<32x512xf32>
    %cst_69 = arith.constant 0.000000e+00 : f32
    %185 = vector.broadcast %cst_69 : f32 to vector<32x512xf32>
    %186 = arith.maximumf %184, %185 : vector<32x512xf32>
    %187 = arith.truncf %186 : vector<32x512xf32> to vector<32x512xbf16>
    %c0_70 = arith.constant 0 : index
    %c0_71 = arith.constant 0 : index
    %188 = vector.load %arg14[%c0_70, %c0_71] : memref<512x128xbf16, #tpu.memory_space<vmem>>, vector<512x128xbf16>
    %cst_72 = arith.constant dense<0.000000e+00> : vector<32x128xf32>
    %189 = tpu.matmul %187, %188, %cst_72 {dimension_numbers = #tpu.dot_dimension_numbers<[1], [0], [0], [1], [0, 0, 1, 1], [], []>} : vector<32x512xbf16>, vector<512x128xbf16>, vector<32x128xf32> -> vector<32x128xf32>
    %c0_73 = arith.constant 0 : index
    %c0_74 = arith.constant 0 : index
    %190 = vector.load %arg15[%c0_73, %c0_74] : memref<1x128xf32, #tpu.memory_space<vmem>>, vector<1x128xf32>
    %191 = vector.shape_cast %190 : vector<1x128xf32> to vector<128xf32>
    %192 = vector.shape_cast %191 : vector<128xf32> to vector<1x128xf32>
    %193 = vector.broadcast %192 : vector<1x128xf32> to vector<32x128xf32>
    %194 = arith.addf %189, %193 : vector<32x128xf32>
    %195 = arith.addf %148, %194 : vector<32x128xf32>
    %196 = vector.shape_cast %195 : vector<32x128xf32> to vector<2x16x128xf32>
    %c0_75 = arith.constant 0 : index
    %c0_76 = arith.constant 0 : index
    %c0_77 = arith.constant 0 : index
    %197 = vector.load %arg16[%c0_75, %c0_76, %c0_77] : memref<2x16x128xf32, #tpu.memory_space<vmem>>, vector<2x16x128xf32>
    tpu.vector_store %arg16[%c0_75, %c0_76, %c0_77], %196 {strides = array<i32>} : memref<2x16x128xf32, #tpu.memory_space<vmem>>, vector<2x16x128xf32>,
    return
  }
  func.func @transform_0(%arg0: i32) -> (i32, i32, i32) {
    %c0_i32 = arith.constant 0 : i32
    %c0_i32_0 = arith.constant 0 : i32
    %c0_i32_1 = arith.constant 0 : i32
    %c0_i32_2 = arith.constant 0 : i32
    return %c0_i32, %c0_i32_0, %c0_i32_1 : i32, i32, i32
  }
  func.func @transform_1(%arg0: i32) -> (i32, i32) {
    %c0_i32 = arith.constant 0 : i32
    %c0_i32_0 = arith.constant 0 : i32
    %c0_i32_1 = arith.constant 0 : i32
    return %c0_i32, %c0_i32_0 : i32, i32
  }
  func.func @transform_2(%arg0: i32) -> (i32, i32) {
    %c0_i32 = arith.constant 0 : i32
    %c0_i32_0 = arith.constant 0 : i32
    %c0_i32_1 = arith.constant 0 : i32
    return %c0_i32, %c0_i32_0 : i32, i32
  }
  func.func @transform_3(%arg0: i32) -> (i32, i32) {
    %c0_i32 = arith.constant 0 : i32
    %c0_i32_0 = arith.constant 0 : i32
    %c0_i32_1 = arith.constant 0 : i32
    return %c0_i32, %c0_i32_0 : i32, i32
  }
  func.func @transform_4(%arg0: i32) -> (i32, i32) {
    %c0_i32 = arith.constant 0 : i32
    %c0_i32_0 = arith.constant 0 : i32
    %c0_i32_1 = arith.constant 0 : i32
    return %c0_i32, %c0_i32_0 : i32, i32
  }
  func.func @transform_5(%arg0: i32) -> (i32, i32) {
    %c0_i32 = arith.constant 0 : i32
    %c0_i32_0 = arith.constant 0 : i32
    %c0_i32_1 = arith.constant 0 : i32
    return %c0_i32, %c0_i32_0 : i32, i32
  }
  func.func @transform_6(%arg0: i32) -> (i32, i32) {
    %c0_i32 = arith.constant 0 : i32
    %c0_i32_0 = arith.constant 0 : i32
    %c0_i32_1 = arith.constant 0 : i32
    return %c0_i32, %c0_i32_0 : i32, i32
  }
  func.func @transform_7(%arg0: i32) -> (i32, i32) {
    %c0_i32 = arith.constant 0 : i32
    %c0_i32_0 = arith.constant 0 : i32
    %c0_i32_1 = arith.constant 0 : i32
    return %c0_i32, %c0_i32_0 : i32, i32
  }
  func.func @transform_8(%arg0: i32) -> (i32, i32) {
    %c0_i32 = arith.constant 0 : i32
    %c0_i32_0 = arith.constant 0 : i32
    %c0_i32_1 = arith.constant 0 : i32
    return %c0_i32, %c0_i32_0 : i32, i32
  }
  func.func @transform_9(%arg0: i32) -> (i32, i32) {
    %c0_i32 = arith.constant 0 : i32
    %c0_i32_0 = arith.constant 0 : i32
    %c0_i32_1 = arith.constant 0 : i32
    return %c0_i32, %c0_i32_0 : i32, i32
  }
  func.func @transform_10(%arg0: i32) -> (i32, i32) {
    %c0_i32 = arith.constant 0 : i32
    %c0_i32_0 = arith.constant 0 : i32
    %c0_i32_1 = arith.constant 0 : i32
    return %c0_i32, %c0_i32_0 : i32, i32
  }
  func.func @transform_11(%arg0: i32) -> (i32, i32) {
    %c0_i32 = arith.constant 0 : i32
    %c0_i32_0 = arith.constant 0 : i32
    %c0_i32_1 = arith.constant 0 : i32
    return %c0_i32, %c0_i32_0 : i32, i32
  }
  func.func @transform_12(%arg0: i32) -> (i32, i32) {
    %c0_i32 = arith.constant 0 : i32
    %c0_i32_0 = arith.constant 0 : i32
    %c0_i32_1 = arith.constant 0 : i32
    return %c0_i32, %c0_i32_0 : i32, i32
  }
  func.func @transform_13(%arg0: i32) -> (i32, i32) {
    %c0_i32 = arith.constant 0 : i32
    %c0_i32_0 = arith.constant 0 : i32
    %c0_i32_1 = arith.constant 0 : i32
    return %c0_i32, %c0_i32_0 : i32, i32
  }
  func.func @transform_14(%arg0: i32) -> (i32, i32) {
    %c0_i32 = arith.constant 0 : i32
    %c0_i32_0 = arith.constant 0 : i32
    %c0_i32_1 = arith.constant 0 : i32
    return %c0_i32, %c0_i32_0 : i32, i32
  }
  func.func @transform_15(%arg0: i32) -> (i32, i32, i32) {
    %c0_i32 = arith.constant 0 : i32
    %c0_i32_0 = arith.constant 0 : i32
    %c0_i32_1 = arith.constant 0 : i32
    %c0_i32_2 = arith.constant 0 : i32
    return %c0_i32, %c0_i32_0, %c0_i32_1 : i32, i32, i32
  }
}

</mosaic_0001>

<llo_original>
// kernel: tpu_custom_call.1
$region0: #{tpu_custom_call.1}
  #allocation0 [shape = 'u32[]', space=smem, size = 0x4, offset = 0x4, fixed_abs, tag = 'smem constant byte address 0x4 - core index']
  #allocation1 [shape = 'u32[144,128]{1,0:T(1,128)}', space=vmem, size = 0x12000, scoped, tag = 'internal scratch']
  %s0 = inlined_call_operand.hbm [shape: f32[2,16,128], index: 0, kind: input, shape index: {}]
  %s1 = inlined_call_operand.hbm [shape: f32[32,32], index: 1, kind: input, shape index: {}]
  %s2 = inlined_call_operand.vmem [shape: f32[1,128], index: 2, kind: input, shape index: {}]
  %s3 = inlined_call_operand.vmem [shape: f32[1,128], index: 3, kind: input, shape index: {}]
  %s4 = inlined_call_operand.hbm [shape: bf16[128,128], index: 4, kind: input, shape index: {}]
  %s5 = inlined_call_operand.hbm [shape: bf16[128,128], index: 5, kind: input, shape index: {}]
  %s6 = inlined_call_operand.hbm [shape: bf16[128,128], index: 6, kind: input, shape index: {}]
  %s7 = inlined_call_operand.hbm [shape: bf16[128,128], index: 7, kind: input, shape index: {}]
  %s8 = inlined_call_operand.vmem [shape: f32[1,128], index: 8, kind: input, shape index: {}]
  %s9 = inlined_call_operand.vmem [shape: f32[1,128], index: 9, kind: input, shape index: {}]
  %s10 = inlined_call_operand.vmem [shape: f32[1,128], index: 10, kind: input, shape index: {}]
  %s11 = inlined_call_operand.hbm [shape: bf16[128,512], index: 11, kind: input, shape index: {}]
  %s12 = inlined_call_operand.vmem [shape: f32[1,512], index: 12, kind: input, shape index: {}]
  %s13 = inlined_call_operand.hbm [shape: bf16[512,128], index: 13, kind: input, shape index: {}]
  %s14 = inlined_call_operand.vmem [shape: f32[1,128], index: 14, kind: input, shape index: {}]
  %s15 = inlined_call_operand.hbm [shape: f32[2,16,128], index: 15, kind: output, shape index: {}]
  %s16 = sld [smem:[#allocation0]]
  $region102: #{tpu_custom_call.1} parent=0
    _
  %s18 = ssub.s32 1, %s16
  %s19 = scalar_select 0, %s18, %s16
  $region1: #{tpu_custom_call.1} parent=0
    #allocation2 [shape = 'u8[16384]{0}', space=vmem, size = 0x4000, scoped, tag = 'input window, operand 0, single buffered']
    #allocation3 [shape = 's32[1]{0}', space=sflag, size = 0x4, scoped, tag = 'scoped memory for tpu_custom_call.1']
    #allocation4 [shape = 's32[1]{0}', space=sflag, size = 0x4, scoped, tag = 'scoped memory for tpu_custom_call.1']
    #allocation5 [shape = 'u8[16384]{0}', space=vmem, size = 0x4000, scoped, tag = 'input window, operand 1, single buffered']
    #allocation6 [shape = 's32[1]{0}', space=sflag, size = 0x4, scoped, tag = 'scoped memory for tpu_custom_call.1']
    #allocation7 [shape = 'u8[32768]{0}', space=vmem, size = 0x8000, scoped, tag = 'input window, operand 4, single buffered']
    #allocation8 [shape = 'u8[32768]{0}', space=vmem, size = 0x8000, scoped, tag = 'input window, operand 5, single buffered']
    #allocation9 [shape = 's32[1]{0}', space=sflag, size = 0x4, scoped, tag = 'scoped memory for tpu_custom_call.1']
    #allocation10 [shape = 'u8[32768]{0}', space=vmem, size = 0x8000, scoped, tag = 'input window, operand 6, single buffered']
    #allocation11 [shape = 'u8[32768]{0}', space=vmem, size = 0x8000, scoped, tag = 'input window, operand 7, single buffered']
    #allocation12 [shape = 's32[1]{0}', space=sflag, size = 0x4, scoped, tag = 'scoped memory for tpu_custom_call.1']
    #allocation13 [shape = 'u8[131072]{0}', space=vmem, size = 0x20000, scoped, tag = 'input window, operand 11, single buffered']
    #allocation14 [shape = 'u8[131072]{0}', space=vmem, size = 0x20000, scoped, tag = 'input window, operand 13, single buffered']
    #allocation15 [shape = 's32[1]{0}', space=sflag, size = 0x4, scoped, tag = 'scoped memory for tpu_custom_call.1']
    #allocation16 [shape = 'u8[16384]{0}', space=vmem, size = 0x4000, scoped, tag = 'output window, operand 0, single buffered']
    %20 = vsyncpa [#allocation3], 0
    %21 = vsyncpa [#allocation6], 0
    %22 = vsyncpa [#allocation9], 0
    %23 = vsyncpa [#allocation12], 0
    %24 = vsyncpa [#allocation15], 0
    %25 = vsyncpa [#allocation4], 0
    // Predicated region
    $region2: #{tpu_custom_call.1} parent=1 // pred_check
      _
    $region3: #{tpu_custom_call.1} parent=1 // pred_check_branch
      %27 = sbr.rel (0) target = $region5
    $region4: #{tpu_custom_call.1} parent=1 // pred_region
      %s29 = ssub.s32 512, 512
      %30 = vsyncadd [#allocation3], %s29
      %s31 = sshll.u32 [#allocation2], 4
      %s32 = int_to_ptr.vmem [resolvable:$true] %s31
      %37 = dma.hbm_to_vmem [thread:$0]  %s0, 512, %s32, [#allocation3], 128, 128, 8
    $region5: #{tpu_custom_call.1} parent=1 // pred_fallthru
      _
    // Predicated region
    $region6: #{tpu_custom_call.1} parent=1 // pred_check
      _
    $region7: #{tpu_custom_call.1} parent=1 // pred_check_branch
      %39 = sbr.rel (0) target = $region9
    $region8: #{tpu_custom_call.1} parent=1 // pred_region
      %s41 = ssub.s32 512, 512
      %42 = vsyncadd [#allocation6], %s41
      %s43 = sshll.u32 [#allocation5], 4
      %s44 = int_to_ptr.vmem [resolvable:$true] %s43
      %49 = dma.hbm_to_vmem [thread:$0]  %s1, 512, %s44, [#allocation6], 128, 128, 8
    $region9: #{tpu_custom_call.1} parent=1 // pred_fallthru
      _
    // Predicated region
    $region10: #{tpu_custom_call.1} parent=1 // pred_check
      _
    $region11: #{tpu_custom_call.1} parent=1 // pred_check_branch
      %51 = sbr.rel (0) target = $region13
    $region12: #{tpu_custom_call.1} parent=1 // pred_region
      _
    $region13: #{tpu_custom_call.1} parent=1 // pred_fallthru
      _
    // Predicated region
    $region14: #{tpu_custom_call.1} parent=1 // pred_check
      _
    $region15: #{tpu_custom_call.1} parent=1 // pred_check_branch
      %53 = sbr.rel (0) target = $region17
    $region16: #{tpu_custom_call.1} parent=1 // pred_region
      _
    $region17: #{tpu_custom_call.1} parent=1 // pred_fallthru
      _
    // Predicated region
    $region18: #{tpu_custom_call.1} parent=1 // pred_check
      _
    $region19: #{tpu_custom_call.1} parent=1 // pred_check_branch
      %55 = sbr.rel (0) target = $region21
    $region20: #{tpu_custom_call.1} parent=1 // pred_region
      %s57 = ssub.s32 1024, 1024
      %58 = vsyncadd [#allocation6], %s57
      %s59 = sshll.u32 [#allocation7], 4
      %s60 = int_to_ptr.vmem [resolvable:$true] %s59
      %65 = dma.hbm_to_vmem [thread:$0]  %s4, 1024, %s60, [#allocation6], 64, 64, 4
    $region21: #{tpu_custom_call.1} parent=1 // pred_fallthru
      _
    // Predicated region
    $region22: #{tpu_custom_call.1} parent=1 // pred_check
      _
    $region23: #{tpu_custom_call.1} parent=1 // pred_check_branch
      %67 = sbr.rel (0) target = $region25
    $region24: #{tpu_custom_call.1} parent=1 // pred_region
      %s69 = ssub.s32 1024, 1024
      %70 = vsyncadd [#allocation9], %s69
      %s71 = sshll.u32 [#allocation8], 4
      %s72 = int_to_ptr.vmem [resolvable:$true] %s71
      %77 = dma.hbm_to_vmem [thread:$0]  %s5, 1024, %s72, [#allocation9], 64, 64, 4
    $region25: #{tpu_custom_call.1} parent=1 // pred_fallthru
      _
    // Predicated region
    $region26: #{tpu_custom_call.1} parent=1 // pred_check
      _
    $region27: #{tpu_custom_call.1} parent=1 // pred_check_branch
      %79 = sbr.rel (0) target = $region29
    $region28: #{tpu_custom_call.1} parent=1 // pred_region
      %s81 = ssub.s32 1024, 1024
      %82 = vsyncadd [#allocation9], %s81
      %s83 = sshll.u32 [#allocation10], 4
      %s84 = int_to_ptr.vmem [resolvable:$true] %s83
      %89 = dma.hbm_to_vmem [thread:$0]  %s6, 1024, %s84, [#allocation9], 64, 64, 4
    $region29: #{tpu_custom_call.1} parent=1 // pred_fallthru
      _
    // Predicated region
    $region30: #{tpu_custom_call.1} parent=1 // pred_check
      _
    $region31: #{tpu_custom_call.1} parent=1 // pred_check_branch
      %91 = sbr.rel (0) target = $region33
    $region32: #{tpu_custom_call.1} parent=1 // pred_region
      %s93 = ssub.s32 1024, 1024
      %94 = vsyncadd [#allocation12], %s93
      %s95 = sshll.u32 [#allocation11], 4
      %s96 = int_to_ptr.vmem [resolvable:$true] %s95
      %101 = dma.hbm_to_vmem [thread:$0]  %s7, 1024, %s96, [#allocation12], 64, 64, 4
    $region33: #{tpu_custom_call.1} parent=1 // pred_fallthru
      _
    // Predicated region
    $region34: #{tpu_custom_call.1} parent=1 // pred_check
      _
    $region35: #{tpu_custom_call.1} parent=1 // pred_check_branch
      %103 = sbr.rel (0) target = $region37
    $region36: #{tpu_custom_call.1} parent=1 // pred_region
      _
    $region37: #{tpu_custom_call.1} parent=1 // pred_fallthru
      _
    // Predicated region
    $region38: #{tpu_custom_call.1} parent=1 // pred_check
      _
    $region39: #{tpu_custom_call.1} parent=1 // pred_check_branch
      %105 = sbr.rel (0) target = $region41
    $region40: #{tpu_custom_call.1} parent=1 // pred_region
      _
    $region41: #{tpu_custom_call.1} parent=1 // pred_fallthru
      _
    // Predicated region
    $region42: #{tpu_custom_call.1} parent=1 // pred_check
      _
    $region43: #{tpu_custom_call.1} parent=1 // pred_check_branch
      %107 = sbr.rel (0) target = $region45
    $region44: #{tpu_custom_call.1} parent=1 // pred_region
      _
    $region45: #{tpu_custom_call.1} parent=1 // pred_fallthru
      _
    // Predicated region
    $region46: #{tpu_custom_call.1} parent=1 // pred_check
      _
    $region47: #{tpu_custom_call.1} parent=1 // pred_check_branch
      %109 = sbr.rel (0) target = $region49
    $region48: #{tpu_custom_call.1} parent=1 // pred_region
      %s111 = ssub.s32 4096, 4096
      %112 = vsyncadd [#allocation12], %s111
      %s113 = sshll.u32 [#allocation13], 4
      %s114 = int_to_ptr.vmem [resolvable:$true] %s113
      %119 = dma.hbm_to_vmem [thread:$0]  %s11, 4096, %s114, [#allocation12], 256, 256, 16
    $region49: #{tpu_custom_call.1} parent=1 // pred_fallthru
      _
    // Predicated region
    $region50: #{tpu_custom_call.1} parent=1 // pred_check
      _
    $region51: #{tpu_custom_call.1} parent=1 // pred_check_branch
      %121 = sbr.rel (0) target = $region53
    $region52: #{tpu_custom_call.1} parent=1 // pred_region
      _
    $region53: #{tpu_custom_call.1} parent=1 // pred_fallthru
      _
    // Predicated region
    $region54: #{tpu_custom_call.1} parent=1 // pred_check
      _
    $region55: #{tpu_custom_call.1} parent=1 // pred_check_branch
      %123 = sbr.rel (0) target = $region57
    $region56: #{tpu_custom_call.1} parent=1 // pred_region
      %s125 = ssub.s32 4096, 4096
      %126 = vsyncadd [#allocation15], %s125
      %s127 = sshll.u32 [#allocation14], 4
      %s128 = int_to_ptr.vmem [resolvable:$true] %s127
      %133 = dma.hbm_to_vmem [thread:$0]  %s13, 4096, %s128, [#allocation15], 64, 64, 4
    $region57: #{tpu_custom_call.1} parent=1 // pred_fallthru
      _
    // Predicated region
    $region58: #{tpu_custom_call.1} parent=1 // pred_check
      _
    $region59: #{tpu_custom_call.1} parent=1 // pred_check_branch
      %135 = sbr.rel (0) target = $region61
    $region60: #{tpu_custom_call.1} parent=1 // pred_region
      _
    $region61: #{tpu_custom_call.1} parent=1 // pred_fallthru
      _
    // Predicated region
    $region62: #{tpu_custom_call.1} parent=1 // pred_check
      _
    $region63: #{tpu_custom_call.1} parent=1 // pred_check_branch
      %137 = sbr.rel (0) target = $region65
    $region64: #{tpu_custom_call.1} parent=1 // pred_region
      %138 = dma.done [#allocation3], 512
    $region65: #{tpu_custom_call.1} parent=1 // pred_fallthru
      _
    // Predicated region
    $region66: #{tpu_custom_call.1} parent=1 // pred_check
      _
    $region67: #{tpu_custom_call.1} parent=1 // pred_check_branch
      %140 = sbr.rel (0) target = $region69
    $region68: #{tpu_custom_call.1} parent=1 // pred_region
      %141 = dma.done [#allocation6], 512
    $region69: #{tpu_custom_call.1} parent=1 // pred_fallthru
      _
    // Predicated region
    $region70: #{tpu_custom_call.1} parent=1 // pred_check
      _
    $region71: #{tpu_custom_call.1} parent=1 // pred_check_branch
      %143 = sbr.rel (0) target = $region73
    $region72: #{tpu_custom_call.1} parent=1 // pred_region
      %144 = dma.done [#allocation6], 1024
    $region73: #{tpu_custom_call.1} parent=1 // pred_fallthru
      _
    // Predicated region
    $region74: #{tpu_custom_call.1} parent=1 // pred_check
      _
    $region75: #{tpu_custom_call.1} parent=1 // pred_check_branch
      %146 = sbr.rel (0) target = $region77
    $region76: #{tpu_custom_call.1} parent=1 // pred_region
      %147 = dma.done [#allocation9], 1024
    $region77: #{tpu_custom_call.1} parent=1 // pred_fallthru
      _
    // Predicated region
    $region78: #{tpu_custom_call.1} parent=1 // pred_check
      _
    $region79: #{tpu_custom_call.1} parent=1 // pred_check_branch
      %149 = sbr.rel (0) target = $region81
    $region80: #{tpu_custom_call.1} parent=1 // pred_region
      %150 = dma.done [#allocation9], 1024
    $region81: #{tpu_custom_call.1} parent=1 // pred_fallthru
      _
    // Predicated region
    $region82: #{tpu_custom_call.1} parent=1 // pred_check
      _
    $region83: #{tpu_custom_call.1} parent=1 // pred_check_branch
      %152 = sbr.rel (0) target = $region85
    $region84: #{tpu_custom_call.1} parent=1 // pred_region
      %153 = dma.done [#allocation12], 1024
    $region85: #{tpu_custom_call.1} parent=1 // pred_fallthru
      _
    // Predicated region
    $region86: #{tpu_custom_call.1} parent=1 // pred_check
      _
    $region87: #{tpu_custom_call.1} parent=1 // pred_check_branch
      %155 = sbr.rel (0) target = $region89
    $region88: #{tpu_custom_call.1} parent=1 // pred_region
      %156 = dma.done [#allocation12], 4096
    $region89: #{tpu_custom_call.1} parent=1 // pred_fallthru
      _
    // Predicated region
    $region90: #{tpu_custom_call.1} parent=1 // pred_check
      _
    $region91: #{tpu_custom_call.1} parent=1 // pred_check_branch
      %158 = sbr.rel (0) target = $region93
    $region92: #{tpu_custom_call.1} parent=1 // pred_region
      %159 = dma.done [#allocation15], 4096
    $region93: #{tpu_custom_call.1} parent=1 // pred_fallthru
      _
    %v161 = vld [vmem:[#allocation2] sm:$0xff]
    %v162 = vld [vmem:[#allocation2 + $0x8] sm:$0xff]
    %v163 = vld [vmem:[#allocation2 + $0x10] sm:$0xff]
    %v164 = vld [vmem:[#allocation2 + $0x18] sm:$0xff]
    %v165 = vld [vmem:[%s2] sm:$0x1]
    %v166 = vld [vmem:[%s3] sm:$0x1]
    %167 = vadd.xlane.f32.xlu0 %v161
    %v168 = vpop.xlane.xlu0 %167
    %169 = vadd.xlane.f32.xlu0 %v162
    %v170 = vpop.xlane.xlu0 %169
    %171 = vadd.xlane.f32.xlu0 %v163
    %v172 = vpop.xlane.xlu0 %171
    %173 = vadd.xlane.f32.xlu0 %v164
    %v174 = vpop.xlane.xlu0 %173
    %v175 = vrcp.pop 128.0
    %v176 = vmul.f32 %v168, %v175
    %v177 = vmul.f32 %v170, %v175
    %v178 = vmul.f32 %v172, %v175
    %v179 = vmul.f32 %v174, %v175
    %v180 = vsub.f32 %v161, %v176
    %v181 = vsub.f32 %v162, %v177
    %v182 = vsub.f32 %v163, %v178
    %v183 = vsub.f32 %v164, %v179
    %v184 = vmul.f32 %v180, %v180
    %v185 = vmul.f32 %v181, %v181
    %v186 = vmul.f32 %v182, %v182
    %v187 = vmul.f32 %v183, %v183
    %188 = vadd.xlane.f32.xlu0 %v184
    %v189 = vpop.xlane.xlu0 %188
    %190 = vadd.xlane.f32.xlu0 %v185
    %v191 = vpop.xlane.xlu0 %190
    %192 = vadd.xlane.f32.xlu0 %v186
    %v193 = vpop.xlane.xlu0 %192
    %194 = vadd.xlane.f32.xlu0 %v187
    %v195 = vpop.xlane.xlu0 %194
    %v196 = vmul.f32 %v189, %v175
    %v197 = vmul.f32 %v191, %v175
    %v198 = vmul.f32 %v193, %v175
    %v199 = vmul.f32 %v195, %v175
    %v200 = vadd.f32 %v196, 1e-05
    %v201 = vadd.f32 %v197, 1e-05
    %v202 = vadd.f32 %v198, 1e-05
    %v203 = vadd.f32 %v199, 1e-05
    %v204 = vrsqrt.pop %v200
    %v205 = vrsqrt.pop %v201
    %v206 = vrsqrt.pop %v202
    %v207 = vrsqrt.pop %v203
    %v208 = vmul.f32 %v180, %v204
    %v209 = vmul.f32 %v181, %v205
    %v210 = vmul.f32 %v182, %v206
    %v211 = vmul.f32 %v183, %v207
    %v213 = vlaneseq
    %v214 = vshrl.u32 %v213, 7
    %v215 = vsub.s32 0, %v214
    %v216 = vrot.slane %v165, %v215
    %v218 = vmul.f32 %v208, %v216
    %v219 = vmul.f32 %v209, %v216
    %v220 = vmul.f32 %v210, %v216
    %v221 = vmul.f32 %v211, %v216
    %v223 = vlaneseq
    %v224 = vshrl.u32 %v223, 7
    %v225 = vsub.s32 0, %v224
    %v226 = vrot.slane %v166, %v225
    %v228 = vadd.f32 %v218, %v226
    %v229 = vadd.f32 %v219, %v226
    %v230 = vadd.f32 %v220, %v226
    %v231 = vadd.f32 %v221, %v226
    %v232 = vpack.c.bf16 %v229, %v228
    %v233 = vpack.c.bf16 %v231, %v230
    %v234 = vld [vmem:[#allocation7] sm:$0xf]
    %v235 = vld [vmem:[#allocation7 + $0x4] sm:$0xf]
    %v236 = vld [vmem:[#allocation7 + $0x8] sm:$0xf]
    %v237 = vld [vmem:[#allocation7 + $0xc] sm:$0xf]
    %v238 = vld [vmem:[#allocation7 + $0x10] sm:$0xf]
    %v239 = vld [vmem:[#allocation7 + $0x14] sm:$0xf]
    %v240 = vld [vmem:[#allocation7 + $0x18] sm:$0xf]
    %v241 = vld [vmem:[#allocation7 + $0x1c] sm:$0xf]
    %v242 = vld [vmem:[#allocation7 + $0x20] sm:$0xf]
    %v243 = vld [vmem:[#allocation7 + $0x24] sm:$0xf]
    %v244 = vld [vmem:[#allocation7 + $0x28] sm:$0xf]
    %v245 = vld [vmem:[#allocation7 + $0x2c] sm:$0xf]
    %v246 = vld [vmem:[#allocation7 + $0x30] sm:$0xf]
    %v247 = vld [vmem:[#allocation7 + $0x34] sm:$0xf]
    %v248 = vld [vmem:[#allocation7 + $0x38] sm:$0xf]
    %v249 = vld [vmem:[#allocation7 + $0x3c] sm:$0xf]
    %v266 = vunpack.c.l.b16 %v234
    %v267 = vunpack.c.l.b16 %v235
    %v268 = vunpack.c.l.b16 %v236
    %v269 = vunpack.c.l.b16 %v237
    %v270 = vunpack.c.l.b16 %v238
    %v271 = vunpack.c.l.b16 %v239
    %v272 = vunpack.c.l.b16 %v240
    %v273 = vunpack.c.l.b16 %v241
    %v274 = vunpack.c.l.b16 %v242
    %v275 = vunpack.c.l.b16 %v243
    %v276 = vunpack.c.l.b16 %v244
    %v277 = vunpack.c.l.b16 %v245
    %v278 = vunpack.c.l.b16 %v246
    %v279 = vunpack.c.l.b16 %v247
    %v280 = vunpack.c.l.b16 %v248
    %v281 = vunpack.c.l.b16 %v249
    %v282 = vpack.c.b16 %v267, %v266
    %v283 = vpack.c.b16 %v269, %v268
    %v284 = vpack.c.b16 %v271, %v270
    %v285 = vpack.c.b16 %v273, %v272
    %v286 = vpack.c.b16 %v275, %v274
    %v287 = vpack.c.b16 %v277, %v276
    %v288 = vpack.c.b16 %v279, %v278
    %v289 = vpack.c.b16 %v281, %v280
    %298 = vmatprep.subr.bf16.mxu0 0
    %299 = vmatpush1.bf16.msra.mxu0 %v282
    %300 = vmatprep.subr.bf16.mxu0 0
    %301 = vmatpush1.bf16.msra.mxu0 %v283
    %302 = vmatprep.subr.bf16.mxu0 0
    %303 = vmatpush1.bf16.msra.mxu0 %v284
    %304 = vmatprep.subr.bf16.mxu0 0
    %305 = vmatpush1.bf16.msra.mxu0 %v285
    %306 = vmatprep.subr.bf16.mxu0 0
    %307 = vmatpush1.bf16.msra.mxu0 %v286
    %308 = vmatprep.subr.bf16.mxu0 0
    %309 = vmatpush1.bf16.msra.mxu0 %v287
    %310 = vmatprep.subr.bf16.mxu0 0
    %311 = vmatpush1.bf16.msra.mxu0 %v288
    %312 = vmatprep.subr.bf16.mxu0 0
    %313 = vmatpush1.bf16.msra.mxu0 %v289
    %314 = vmatprep.subr.bf16.mxu0 0
    %315 = vmatpush1.bf16.msra.mxu0 0
    %316 = vmatprep.subr.bf16.mxu0 0
    %317 = vmatpush1.bf16.msra.mxu0 0
    %318 = vmatprep.subr.bf16.mxu0 0
    %319 = vmatpush1.bf16.msra.mxu0 0
    %320 = vmatprep.subr.bf16.mxu0 0
    %321 = vmatpush1.bf16.msra.mxu0 0
    %322 = vmatprep.subr.bf16.mxu0 0
    %323 = vmatpush1.bf16.msra.mxu0 0
    %324 = vmatprep.subr.bf16.mxu0 0
    %325 = vmatpush1.bf16.msra.mxu0 0
    %326 = vmatprep.subr.bf16.mxu0 0
    %327 = vmatpush1.bf16.msra.mxu0 0
    %328 = vmatprep.subr.bf16.mxu0 0
    %329 = vmatpush1.bf16.msra.mxu0 0
    %330 = vmatprep.mubr.bf16.mxu0 0
    %331 = vmatmul.mubr.bf16.gmra.mrb[0].mxu0 %v232
    %v332 = vpop.f32.mrb[0].mxu0
    %v333 = vadd.f32 0.0, %v332
    %v334 = vpop.f32.mrb[0].mxu0
    %v335 = vpop.f32.mrb[0].mxu0
    %v336 = vadd.f32 0.0, %v335
    %v337 = vpop.f32.mrb[0].mxu0
    %338 = vmatprep.mubr.bf16.mxu0 0
    %339 = vmatmul.mubr.bf16.gmra.mrb[0].mxu0 %v233
    %v340 = vpop.f32.mrb[0].mxu0
    %v341 = vadd.f32 0.0, %v340
    %v342 = vpop.f32.mrb[0].mxu0
    %v343 = vpop.f32.mrb[0].mxu0
    %v344 = vadd.f32 0.0, %v343
    %v345 = vpop.f32.mrb[0].mxu0
    %346 = vdwg.mxu0
    %v347 = vmul.f32 %v333, 0.088388346
    %v348 = vmul.f32 %v336, 0.088388346
    %v349 = vmul.f32 %v341, 0.088388346
    %v350 = vmul.f32 %v344, 0.088388346
    %v351 = vld [vmem:[#allocation8] sm:$0xf]
    %v352 = vld [vmem:[#allocation8 + $0x4] sm:$0xf]
    %v353 = vld [vmem:[#allocation8 + $0x8] sm:$0xf]
    %v354 = vld [vmem:[#allocation8 + $0xc] sm:$0xf]
    %v355 = vld [vmem:[#allocation8 + $0x10] sm:$0xf]
    %v356 = vld [vmem:[#allocation8 + $0x14] sm:$0xf]
    %v357 = vld [vmem:[#allocation8 + $0x18] sm:$0xf]
    %v358 = vld [vmem:[#allocation8 + $0x1c] sm:$0xf]
    %v359 = vld [vmem:[#allocation8 + $0x20] sm:$0xf]
    %v360 = vld [vmem:[#allocation8 + $0x24] sm:$0xf]
    %v361 = vld [vmem:[#allocation8 + $0x28] sm:$0xf]
    %v362 = vld [vmem:[#allocation8 + $0x2c] sm:$0xf]
    %v363 = vld [vmem:[#allocation8 + $0x30] sm:$0xf]
    %v364 = vld [vmem:[#allocation8 + $0x34] sm:$0xf]
    %v365 = vld [vmem:[#allocation8 + $0x38] sm:$0xf]
    %v366 = vld [vmem:[#allocation8 + $0x3c] sm:$0xf]
    %v383 = vunpack.c.l.b16 %v351
    %v384 = vunpack.c.l.b16 %v352
    %v385 = vunpack.c.l.b16 %v353
    %v386 = vunpack.c.l.b16 %v354
    %v387 = vunpack.c.l.b16 %v355
    %v388 = vunpack.c.l.b16 %v356
    %v389 = vunpack.c.l.b16 %v357
    %v390 = vunpack.c.l.b16 %v358
    %v391 = vunpack.c.l.b16 %v359
    %v392 = vunpack.c.l.b16 %v360
    %v393 = vunpack.c.l.b16 %v361
    %v394 = vunpack.c.l.b16 %v362
    %v395 = vunpack.c.l.b16 %v363
    %v396 = vunpack.c.l.b16 %v364
    %v397 = vunpack.c.l.b16 %v365
    %v398 = vunpack.c.l.b16 %v366
    %v399 = vpack.c.b16 %v384, %v383
    %v400 = vpack.c.b16 %v386, %v385
    %v401 = vpack.c.b16 %v388, %v387
    %v402 = vpack.c.b16 %v390, %v389
    %v403 = vpack.c.b16 %v392, %v391
    %v404 = vpack.c.b16 %v394, %v393
    %v405 = vpack.c.b16 %v396, %v395
    %v406 = vpack.c.b16 %v398, %v397
    %415 = vmatprep.subr.bf16.mxu0 0
    %416 = vmatpush1.bf16.msra.mxu0 %v399
    %417 = vmatprep.subr.bf16.mxu0 0
    %418 = vmatpush1.bf16.msra.mxu0 %v400
    %419 = vmatprep.subr.bf16.mxu0 0
    %420 = vmatpush1.bf16.msra.mxu0 %v401
    %421 = vmatprep.subr.bf16.mxu0 0
    %422 = vmatpush1.bf16.msra.mxu0 %v402
    %423 = vmatprep.subr.bf16.mxu0 0
    %424 = vmatpush1.bf16.msra.mxu0 %v403
    %425 = vmatprep.subr.bf16.mxu0 0
    %426 = vmatpush1.bf16.msra.mxu0 %v404
    %427 = vmatprep.subr.bf16.mxu0 0
    %428 = vmatpush1.bf16.msra.mxu0 %v405
    %429 = vmatprep.subr.bf16.mxu0 0
    %430 = vmatpush1.bf16.msra.mxu0 %v406
    %431 = vmatprep.subr.bf16.mxu0 0
    %432 = vmatpush1.bf16.msra.mxu0 0
    %433 = vmatprep.subr.bf16.mxu0 0
    %434 = vmatpush1.bf16.msra.mxu0 0
    %435 = vmatprep.subr.bf16.mxu0 0
    %436 = vmatpush1.bf16.msra.mxu0 0
    %437 = vmatprep.subr.bf16.mxu0 0
    %438 = vmatpush1.bf16.msra.mxu0 0
    %439 = vmatprep.subr.bf16.mxu0 0
    %440 = vmatpush1.bf16.msra.mxu0 0
    %441 = vmatprep.subr.bf16.mxu0 0
    %442 = vmatpush1.bf16.msra.mxu0 0
    %443 = vmatprep.subr.bf16.mxu0 0
    %444 = vmatpush1.bf16.msra.mxu0 0
    %445 = vmatprep.subr.bf16.mxu0 0
    %446 = vmatpush1.bf16.msra.mxu0 0
    %447 = vmatprep.mubr.bf16.mxu0 0
    %448 = vmatmul.mubr.bf16.gmra.mrb[0].mxu0 %v232
    %v449 = vpop.f32.mrb[0].mxu0
    %v450 = vadd.f32 0.0, %v449
    %v451 = vpop.f32.mrb[0].mxu0
    %v452 = vpop.f32.mrb[0].mxu0
    %v453 = vadd.f32 0.0, %v452
    %v454 = vpop.f32.mrb[0].mxu0
    %455 = vmatprep.mubr.bf16.mxu0 0
    %456 = vmatmul.mubr.bf16.gmra.mrb[0].mxu0 %v233
    %v457 = vpop.f32.mrb[0].mxu0
    %v458 = vadd.f32 0.0, %v457
    %v459 = vpop.f32.mrb[0].mxu0
    %v460 = vpop.f32.mrb[0].mxu0
    %v461 = vadd.f32 0.0, %v460
    %v462 = vpop.f32.mrb[0].mxu0
    %463 = vdwg.mxu0
    %v464 = vld [vmem:[#allocation10] sm:$0xf]
    %v465 = vld [vmem:[#allocation10 + $0x4] sm:$0xf]
    %v466 = vld [vmem:[#allocation10 + $0x8] sm:$0xf]
    %v467 = vld [vmem:[#allocation10 + $0xc] sm:$0xf]
    %v468 = vld [vmem:[#allocation10 + $0x10] sm:$0xf]
    %v469 = vld [vmem:[#allocation10 + $0x14] sm:$0xf]
    %v470 = vld [vmem:[#allocation10 + $0x18] sm:$0xf]
    %v471 = vld [vmem:[#allocation10 + $0x1c] sm:$0xf]
    %v472 = vld [vmem:[#allocation10 + $0x20] sm:$0xf]
    %v473 = vld [vmem:[#allocation10 + $0x24] sm:$0xf]
    %v474 = vld [vmem:[#allocation10 + $0x28] sm:$0xf]
    %v475 = vld [vmem:[#allocation10 + $0x2c] sm:$0xf]
    %v476 = vld [vmem:[#allocation10 + $0x30] sm:$0xf]
    %v477 = vld [vmem:[#allocation10 + $0x34] sm:$0xf]
    %v478 = vld [vmem:[#allocation10 + $0x38] sm:$0xf]
    %v479 = vld [vmem:[#allocation10 + $0x3c] sm:$0xf]
    %v496 = vunpack.c.l.b16 %v464
    %v497 = vunpack.c.l.b16 %v465
    %v498 = vunpack.c.l.b16 %v466
    %v499 = vunpack.c.l.b16 %v467
    %v500 = vunpack.c.l.b16 %v468
    %v501 = vunpack.c.l.b16 %v469
    %v502 = vunpack.c.l.b16 %v470
    %v503 = vunpack.c.l.b16 %v471
    %v504 = vunpack.c.l.b16 %v472
    %v505 = vunpack.c.l.b16 %v473
    %v506 = vunpack.c.l.b16 %v474
    %v507 = vunpack.c.l.b16 %v475
    %v508 = vunpack.c.l.b16 %v476
    %v509 = vunpack.c.l.b16 %v477
    %v510 = vunpack.c.l.b16 %v478
    %v511 = vunpack.c.l.b16 %v479
    %v512 = vpack.c.b16 %v497, %v496
    %v513 = vpack.c.b16 %v499, %v498
    %v514 = vpack.c.b16 %v501, %v500
    %v515 = vpack.c.b16 %v503, %v502
    %v516 = vpack.c.b16 %v505, %v504
    %v517 = vpack.c.b16 %v507, %v506
    %v518 = vpack.c.b16 %v509, %v508
    %v519 = vpack.c.b16 %v511, %v510
    %528 = vmatprep.subr.bf16.mxu0 0
    %529 = vmatpush1.bf16.msra.mxu0 %v512
    %530 = vmatprep.subr.bf16.mxu0 0
    %531 = vmatpush1.bf16.msra.mxu0 %v513
    %532 = vmatprep.subr.bf16.mxu0 0
    %533 = vmatpush1.bf16.msra.mxu0 %v514
    %534 = vmatprep.subr.bf16.mxu0 0
    %535 = vmatpush1.bf16.msra.mxu0 %v515
    %536 = vmatprep.subr.bf16.mxu0 0
    %537 = vmatpush1.bf16.msra.mxu0 %v516
    %538 = vmatprep.subr.bf16.mxu0 0
    %539 = vmatpush1.bf16.msra.mxu0 %v517
    %540 = vmatprep.subr.bf16.mxu0 0
    %541 = vmatpush1.bf16.msra.mxu0 %v518
    %542 = vmatprep.subr.bf16.mxu0 0
    %543 = vmatpush1.bf16.msra.mxu0 %v519
    %544 = vmatprep.subr.bf16.mxu0 0
    %545 = vmatpush1.bf16.msra.mxu0 0
    %546 = vmatprep.subr.bf16.mxu0 0
    %547 = vmatpush1.bf16.msra.mxu0 0
    %548 = vmatprep.subr.bf16.mxu0 0
    %549 = vmatpush1.bf16.msra.mxu0 0
    %550 = vmatprep.subr.bf16.mxu0 0
    %551 = vmatpush1.bf16.msra.mxu0 0
    %552 = vmatprep.subr.bf16.mxu0 0
    %553 = vmatpush1.bf16.msra.mxu0 0
    %554 = vmatprep.subr.bf16.mxu0 0
    %555 = vmatpush1.bf16.msra.mxu0 0
    %556 = vmatprep.subr.bf16.mxu0 0
    %557 = vmatpush1.bf16.msra.mxu0 0
    %558 = vmatprep.subr.bf16.mxu0 0
    %559 = vmatpush1.bf16.msra.mxu0 0
    %560 = vmatprep.mubr.bf16.mxu0 0
    %561 = vmatmul.mubr.bf16.gmra.mrb[0].mxu0 %v232
    %v562 = vpop.f32.mrb[0].mxu0
    %v563 = vadd.f32 0.0, %v562
    %v564 = vpop.f32.mrb[0].mxu0
    %v565 = vpop.f32.mrb[0].mxu0
    %v566 = vadd.f32 0.0, %v565
    %v567 = vpop.f32.mrb[0].mxu0
    %568 = vmatprep.mubr.bf16.mxu0 0
    %569 = vmatmul.mubr.bf16.gmra.mrb[0].mxu0 %v233
    %v570 = vpop.f32.mrb[0].mxu0
    %v571 = vadd.f32 0.0, %v570
    %v572 = vpop.f32.mrb[0].mxu0
    %v573 = vpop.f32.mrb[0].mxu0
    %v574 = vadd.f32 0.0, %v573
    %v575 = vpop.f32.mrb[0].mxu0
    %576 = vdwg.mxu0
    %v577 = vld [vmem:[#allocation5] sm:$0xff]
    %v578 = vld [vmem:[#allocation5 + $0x8] sm:$0xff]
    %v579 = vld [vmem:[#allocation5 + $0x10] sm:$0xff]
    %v580 = vld [vmem:[#allocation5 + $0x18] sm:$0xff]
    %vm581 = vcmp.gt.f32.partialorder %v577, 0.0
    %vm582 = vcmp.gt.f32.partialorder %v578, 0.0
    %vm583 = vcmp.gt.f32.partialorder %v579, 0.0
    %vm584 = vcmp.gt.f32.partialorder %v580, 0.0
    %v585 = vpack.c.bf16 %v348, %v347
    %v586 = vpack.c.bf16 %v350, %v349
    %v587 = vpack.c.bf16 %v453, %v450
    %v588 = vpack.c.bf16 %v461, %v458
    %v589 = vpack.c.bf16 %v566, %v563
    %v590 = vpack.c.bf16 %v574, %v571
    %vm591 = vcmask 261120
    %v593 = vsel %vm591, %v585, 0
    %v596 = vsel %vm591, %v586, 0
    %v599 = vsel %vm591, %v587, 0
    %v602 = vsel %vm591, %v588, 0
    %604 = vmatprep.subr.bf16.mxu0 0
    %605 = vmatpush1.bf16.xpose.msra.mxu0 %v599
    %606 = vmatprep.subr.bf16.mxu0 0
    %607 = vmatpush1.bf16.xpose.msra.mxu0 %v602
    %608 = vmatprep.subr.bf16.mxu0 0
    %609 = vmatpush1.bf16.xpose.msra.mxu0 0
    %610 = vmatprep.subr.bf16.mxu0 0
    %611 = vmatpush1.bf16.xpose.msra.mxu0 0
    %612 = vmatprep.subr.bf16.mxu0 0
    %613 = vmatpush1.bf16.xpose.msra.mxu0 0
    %614 = vmatprep.subr.bf16.mxu0 0
    %615 = vmatpush1.bf16.xpose.msra.mxu0 0
    %616 = vmatprep.subr.bf16.mxu0 0
    %617 = vmatpush1.bf16.xpose.msra.mxu0 0
    %618 = vmatprep.subr.bf16.mxu0 0
    %619 = vmatpush1.bf16.xpose.msra.mxu0 0
    %620 = vmatprep.subr.bf16.mxu0 0
    %621 = vmatpush1.bf16.xpose.msra.mxu0 0
    %622 = vmatprep.subr.bf16.mxu0 0
    %623 = vmatpush1.bf16.xpose.msra.mxu0 0
    %624 = vmatprep.subr.bf16.mxu0 0
    %625 = vmatpush1.bf16.xpose.msra.mxu0 0
    %626 = vmatprep.subr.bf16.mxu0 0
    %627 = vmatpush1.bf16.xpose.msra.mxu0 0
    %628 = vmatprep.subr.bf16.mxu0 0
    %629 = vmatpush1.bf16.xpose.msra.mxu0 0
    %630 = vmatprep.subr.bf16.mxu0 0
    %631 = vmatpush1.bf16.xpose.msra.mxu0 0
    %632 = vmatprep.subr.bf16.mxu0 0
    %633 = vmatpush1.bf16.xpose.msra.mxu0 0
    %634 = vmatprep.subr.bf16.mxu0 0
    %635 = vmatpush1.bf16.xpose.msra.mxu0 0
    %636 = vmatprep.mubr.bf16.mxu0 0
    %637 = vmatmul.mubr.bf16.gmra.mrb[0].mxu0 %v593
    %v638 = vpop.f32.mrb[0].mxu0
    %v639 = vadd.f32 0.0, %v638
    %v640 = vpop.f32.mrb[0].mxu0
    %v641 = vpop.f32.mrb[0].mxu0
    %v642 = vadd.f32 0.0, %v641
    %v643 = vpop.f32.mrb[0].mxu0
    %644 = vmatprep.mubr.bf16.mxu0 0
    %645 = vmatmul.mubr.bf16.gmra.mrb[0].mxu0 %v596
    %v646 = vpop.f32.mrb[0].mxu0
    %v647 = vadd.f32 0.0, %v646
    %v648 = vpop.f32.mrb[0].mxu0
    %v649 = vpop.f32.mrb[0].mxu0
    %v650 = vadd.f32 0.0, %v649
    %v651 = vpop.f32.mrb[0].mxu0
    %652 = vdwg.mxu0
    %v653 = vsel %vm581, %v639, -inf
    %v654 = vsel %vm582, %v642, -inf
    %v655 = vsel %vm583, %v647, -inf
    %v656 = vsel %vm584, %v650, -inf
    %v657 = vsel %vm591, %v653, -inf
    %658 = vmax.xlane.f32.xlu0 %v657
    %v659 = vpop.xlane.xlu0 %658
    %v660 = vsel %vm591, %v654, -inf
    %661 = vmax.xlane.f32.xlu0 %v660
    %v662 = vpop.xlane.xlu0 %661
    %v663 = vsel %vm591, %v655, -inf
    %664 = vmax.xlane.f32.xlu0 %v663
    %v665 = vpop.xlane.xlu0 %664
    %v666 = vsel %vm591, %v656, -inf
    %667 = vmax.xlane.f32.xlu0 %v666
    %v668 = vpop.xlane.xlu0 %667
    %v669 = vsub.f32 %v653, %v659
    %v670 = vsub.f32 %v654, %v662
    %v671 = vsub.f32 %v655, %v665
    %v672 = vsub.f32 %v656, %v668
    %v673 = vmul.f32 %v669, 1.442695
    %v674 = vpow.pop %v673
    %v675 = vmul.f32 %v670, 1.442695
    %v676 = vpow.pop %v675
    %v677 = vmul.f32 %v671, 1.442695
    %v678 = vpow.pop %v677
    %v679 = vmul.f32 %v672, 1.442695
    %v680 = vpow.pop %v679
    %v681 = vsel %vm591, %v674, 0.0
    %682 = vadd.xlane.f32.xlu0 %v681
    %v683 = vpop.xlane.xlu0 %682
    %v684 = vsel %vm591, %v676, 0.0
    %685 = vadd.xlane.f32.xlu0 %v684
    %v686 = vpop.xlane.xlu0 %685
    %v687 = vsel %vm591, %v678, 0.0
    %688 = vadd.xlane.f32.xlu0 %v687
    %v689 = vpop.xlane.xlu0 %688
    %v690 = vsel %vm591, %v680, 0.0
    %691 = vadd.xlane.f32.xlu0 %v690
    %v692 = vpop.xlane.xlu0 %691
    %v693 = vrcp.pop %v683
    %v694 = vrcp.pop %v686
    %v695 = vrcp.pop %v689
    %v696 = vrcp.pop %v692
    %v697 = vmul.f32 %v674, %v693
    %v698 = vmul.f32 %v676, %v694
    %v699 = vmul.f32 %v678, %v695
    %v700 = vmul.f32 %v680, %v696
    %v701 = vpack.c.bf16 %v698, %v697
    %v702 = vpack.c.bf16 %v700, %v699
    %v704 = vsel %vm591, %v701, 0
    %v707 = vsel %vm591, %v702, 0
    %709 = vmatprep.subr.bf16.mxu0 0
    %710 = vmatpush1.bf16.msra.mxu0 %v589
    %711 = vmatprep.subr.bf16.mxu0 0
    %712 = vmatpush1.bf16.msra.mxu0 %v590
    %713 = vmatprep.subr.bf16.mxu0 0
    %714 = vmatpush1.bf16.msra.mxu0 0
    %715 = vmatprep.subr.bf16.mxu0 0
    %716 = vmatpush1.bf16.msra.mxu0 0
    %717 = vmatprep.subr.bf16.mxu0 0
    %718 = vmatpush1.bf16.msra.mxu0 0
    %719 = vmatprep.subr.bf16.mxu0 0
    %720 = vmatpush1.bf16.msra.mxu0 0
    %721 = vmatprep.subr.bf16.mxu0 0
    %722 = vmatpush1.bf16.msra.mxu0 0
    %723 = vmatprep.subr.bf16.mxu0 0
    %724 = vmatpush1.bf16.msra.mxu0 0
    %725 = vmatprep.subr.bf16.mxu0 0
    %726 = vmatpush1.bf16.msra.mxu0 0
    %727 = vmatprep.subr.bf16.mxu0 0
    %728 = vmatpush1.bf16.msra.mxu0 0
    %729 = vmatprep.subr.bf16.mxu0 0
    %730 = vmatpush1.bf16.msra.mxu0 0
    %731 = vmatprep.subr.bf16.mxu0 0
    %732 = vmatpush1.bf16.msra.mxu0 0
    %733 = vmatprep.subr.bf16.mxu0 0
    %734 = vmatpush1.bf16.msra.mxu0 0
    %735 = vmatprep.subr.bf16.mxu0 0
    %736 = vmatpush1.bf16.msra.mxu0 0
    %737 = vmatprep.subr.bf16.mxu0 0
    %738 = vmatpush1.bf16.msra.mxu0 0
    %739 = vmatprep.subr.bf16.mxu0 0
    %740 = vmatpush1.bf16.msra.mxu0 0
    %741 = vmatprep.mubr.bf16.mxu0 0
    %742 = vmatmul.mubr.bf16.gmra.mrb[0].mxu0 %v704
    %v743 = vpop.f32.mrb[0].mxu0
    %v744 = vadd.f32 0.0, %v743
    %v745 = vpop.f32.mrb[0].mxu0
    %v746 = vpop.f32.mrb[0].mxu0
    %v747 = vadd.f32 0.0, %v746
    %v748 = vpop.f32.mrb[0].mxu0
    %749 = vmatprep.mubr.bf16.mxu0 0
    %750 = vmatmul.mubr.bf16.gmra.mrb[0].mxu0 %v707
    %v751 = vpop.f32.mrb[0].mxu0
    %v752 = vadd.f32 0.0, %v751
    %v753 = vpop.f32.mrb[0].mxu0
    %v754 = vpop.f32.mrb[0].mxu0
    %v755 = vadd.f32 0.0, %v754
    %v756 = vpop.f32.mrb[0].mxu0
    %757 = vdwg.mxu0
    %v758 = vpack.c.bf16 %v747, %v744
    %v759 = vpack.c.bf16 %v755, %v752
    %v760 = vld [vmem:[#allocation11] sm:$0xf]
    %v761 = vld [vmem:[#allocation11 + $0x4] sm:$0xf]
    %v762 = vld [vmem:[#allocation11 + $0x8] sm:$0xf]
    %v763 = vld [vmem:[#allocation11 + $0xc] sm:$0xf]
    %766 = vrot.lane.b32.xlu0 %v585, 96
    %v767 = vpop.permute.xlu0 %766
    %768 = vrot.lane.b32.xlu0 %v586, 96
    %v769 = vpop.permute.xlu0 %768
    %772 = vrot.lane.b32.xlu0 %v587, 96
    %v773 = vpop.permute.xlu0 %772
    %774 = vrot.lane.b32.xlu0 %v588, 96
    %v775 = vpop.permute.xlu0 %774
    %v777 = vsel %vm591, %v767, 0
    %v780 = vsel %vm591, %v769, 0
    %v783 = vsel %vm591, %v773, 0
    %v786 = vsel %vm591, %v775, 0
    %788 = vmatprep.subr.bf16.mxu0 0
    %789 = vmatpush1.bf16.xpose.msra.mxu0 %v783
    %790 = vmatprep.subr.bf16.mxu0 0
    %791 = vmatpush1.bf16.xpose.msra.mxu0 %v786
    %792 = vmatprep.subr.bf16.mxu0 0
    %793 = vmatpush1.bf16.xpose.msra.mxu0 0
    %794 = vmatprep.subr.bf16.mxu0 0
    %795 = vmatpush1.bf16.xpose.msra.mxu0 0
    %796 = vmatprep.subr.bf16.mxu0 0
    %797 = vmatpush1.bf16.xpose.msra.mxu0 0
    %798 = vmatprep.subr.bf16.mxu0 0
    %799 = vmatpush1.bf16.xpose.msra.mxu0 0
    %800 = vmatprep.subr.bf16.mxu0 0
    %801 = vmatpush1.bf16.xpose.msra.mxu0 0
    %802 = vmatprep.subr.bf16.mxu0 0
    %803 = vmatpush1.bf16.xpose.msra.mxu0 0
    %804 = vmatprep.subr.bf16.mxu0 0
    %805 = vmatpush1.bf16.xpose.msra.mxu0 0
    %806 = vmatprep.subr.bf16.mxu0 0
    %807 = vmatpush1.bf16.xpose.msra.mxu0 0
    %808 = vmatprep.subr.bf16.mxu0 0
    %809 = vmatpush1.bf16.xpose.msra.mxu0 0
    %810 = vmatprep.subr.bf16.mxu0 0
    %811 = vmatpush1.bf16.xpose.msra.mxu0 0
    %812 = vmatprep.subr.bf16.mxu0 0
    %813 = vmatpush1.bf16.xpose.msra.mxu0 0
    %814 = vmatprep.subr.bf16.mxu0 0
    %815 = vmatpush1.bf16.xpose.msra.mxu0 0
    %816 = vmatprep.subr.bf16.mxu0 0
    %817 = vmatpush1.bf16.xpose.msra.mxu0 0
    %818 = vmatprep.subr.bf16.mxu0 0
    %819 = vmatpush1.bf16.xpose.msra.mxu0 0
    %820 = vmatprep.mubr.bf16.mxu0 0
    %821 = vmatmul.mubr.bf16.gmra.mrb[0].mxu0 %v777
    %v822 = vpop.f32.mrb[0].mxu0
    %v823 = vadd.f32 0.0, %v822
    %v824 = vpop.f32.mrb[0].mxu0
    %v825 = vpop.f32.mrb[0].mxu0
    %v826 = vadd.f32 0.0, %v825
    %v827 = vpop.f32.mrb[0].mxu0
    %828 = vmatprep.mubr.bf16.mxu0 0
    %829 = vmatmul.mubr.bf16.gmra.mrb[0].mxu0 %v780
    %v830 = vpop.f32.mrb[0].mxu0
    %v831 = vadd.f32 0.0, %v830
    %v832 = vpop.f32.mrb[0].mxu0
    %v833 = vpop.f32.mrb[0].mxu0
    %v834 = vadd.f32 0.0, %v833
    %v835 = vpop.f32.mrb[0].mxu0
    %836 = vdwg.mxu0
    %v837 = vsel %vm581, %v823, -inf
    %v838 = vsel %vm582, %v826, -inf
    %v839 = vsel %vm583, %v831, -inf
    %v840 = vsel %vm584, %v834, -inf
    %v841 = vsel %vm591, %v837, -inf
    %842 = vmax.xlane.f32.xlu0 %v841
    %v843 = vpop.xlane.xlu0 %842
    %v844 = vsel %vm591, %v838, -inf
    %845 = vmax.xlane.f32.xlu0 %v844
    %v846 = vpop.xlane.xlu0 %845
    %v847 = vsel %vm591, %v839, -inf
    %848 = vmax.xlane.f32.xlu0 %v847
    %v849 = vpop.xlane.xlu0 %848
    %v850 = vsel %vm591, %v840, -inf
    %851 = vmax.xlane.f32.xlu0 %v850
    %v852 = vpop.xlane.xlu0 %851
    %v853 = vsub.f32 %v837, %v843
    %v854 = vsub.f32 %v838, %v846
    %v855 = vsub.f32 %v839, %v849
    %v856 = vsub.f32 %v840, %v852
    %v857 = vmul.f32 %v853, 1.442695
    %v858 = vpow.pop %v857
    %v859 = vmul.f32 %v854, 1.442695
    %v860 = vpow.pop %v859
    %v861 = vmul.f32 %v855, 1.442695
    %v862 = vpow.pop %v861
    %v863 = vmul.f32 %v856, 1.442695
    %v864 = vpow.pop %v863
    %v865 = vsel %vm591, %v858, 0.0
    %866 = vadd.xlane.f32.xlu0 %v865
    %v867 = vpop.xlane.xlu0 %866
    %v868 = vsel %vm591, %v860, 0.0
    %869 = vadd.xlane.f32.xlu0 %v868
    %v870 = vpop.xlane.xlu0 %869
    %v871 = vsel %vm591, %v862, 0.0
    %872 = vadd.xlane.f32.xlu0 %v871
    %v873 = vpop.xlane.xlu0 %872
    %v874 = vsel %vm591, %v864, 0.0
    %875 = vadd.xlane.f32.xlu0 %v874
    %v876 = vpop.xlane.xlu0 %875
    %v877 = vrcp.pop %v867
    %v878 = vrcp.pop %v870
    %v879 = vrcp.pop %v873
    %v880 = vrcp.pop %v876
    %v881 = vmul.f32 %v858, %v877
    %v882 = vmul.f32 %v860, %v878
    %v883 = vmul.f32 %v862, %v879
    %v884 = vmul.f32 %v864, %v880
    %v885 = vpack.c.bf16 %v882, %v881
    %v886 = vpack.c.bf16 %v884, %v883
    %889 = vrot.lane.b32.xlu0 %v589, 96
    %v890 = vpop.permute.xlu0 %889
    %891 = vrot.lane.b32.xlu0 %v590, 96
    %v892 = vpop.permute.xlu0 %891
    %v896 = vsel %vm591, %v885, 0
    %v899 = vsel %vm591, %v886, 0
    %901 = vmatprep.subr.bf16.mxu0 0
    %902 = vmatpush1.bf16.msra.mxu0 %v890
    %903 = vmatprep.subr.bf16.mxu0 0
    %904 = vmatpush1.bf16.msra.mxu0 %v892
    %905 = vmatprep.subr.bf16.mxu0 0
    %906 = vmatpush1.bf16.msra.mxu0 0
    %907 = vmatprep.subr.bf16.mxu0 0
    %908 = vmatpush1.bf16.msra.mxu0 0
    %909 = vmatprep.subr.bf16.mxu0 0
    %910 = vmatpush1.bf16.msra.mxu0 0
    %911 = vmatprep.subr.bf16.mxu0 0
    %912 = vmatpush1.bf16.msra.mxu0 0
    %913 = vmatprep.subr.bf16.mxu0 0
    %914 = vmatpush1.bf16.msra.mxu0 0
    %915 = vmatprep.subr.bf16.mxu0 0
    %916 = vmatpush1.bf16.msra.mxu0 0
    %917 = vmatprep.subr.bf16.mxu0 0
    %918 = vmatpush1.bf16.msra.mxu0 0
    %919 = vmatprep.subr.bf16.mxu0 0
    %920 = vmatpush1.bf16.msra.mxu0 0
    %921 = vmatprep.subr.bf16.mxu0 0
    %922 = vmatpush1.bf16.msra.mxu0 0
    %923 = vmatprep.subr.bf16.mxu0 0
    %924 = vmatpush1.bf16.msra.mxu0 0
    %925 = vmatprep.subr.bf16.mxu0 0
    %926 = vmatpush1.bf16.msra.mxu0 0
    %927 = vmatprep.subr.bf16.mxu0 0
    %928 = vmatpush1.bf16.msra.mxu0 0
    %929 = vmatprep.subr.bf16.mxu0 0
    %930 = vmatpush1.bf16.msra.mxu0 0
    %931 = vmatprep.subr.bf16.mxu0 0
    %932 = vmatpush1.bf16.msra.mxu0 0
    %933 = vmatprep.mubr.bf16.mxu0 0
    %934 = vmatmul.mubr.bf16.gmra.mrb[0].mxu0 %v896
    %v935 = vpop.f32.mrb[0].mxu0
    %v936 = vadd.f32 0.0, %v935
    %v937 = vpop.f32.mrb[0].mxu0
    %v938 = vpop.f32.mrb[0].mxu0
    %v939 = vadd.f32 0.0, %v938
    %v940 = vpop.f32.mrb[0].mxu0
    %941 = vmatprep.mubr.bf16.mxu0 0
    %942 = vmatmul.mubr.bf16.gmra.mrb[0].mxu0 %v899
    %v943 = vpop.f32.mrb[0].mxu0
    %v944 = vadd.f32 0.0, %v943
    %v945 = vpop.f32.mrb[0].mxu0
    %v946 = vpop.f32.mrb[0].mxu0
    %v947 = vadd.f32 0.0, %v946
    %v948 = vpop.f32.mrb[0].mxu0
    %949 = vdwg.mxu0
    %v950 = vpack.c.bf16 %v939, %v936
    %v951 = vpack.c.bf16 %v947, %v944
    %v952 = vld [vmem:[#allocation11 + $0x10] sm:$0xf]
    %v953 = vld [vmem:[#allocation11 + $0x14] sm:$0xf]
    %v954 = vld [vmem:[#allocation11 + $0x18] sm:$0xf]
    %v955 = vld [vmem:[#allocation11 + $0x1c] sm:$0xf]
    %v960 = vunpack.c.l.b16 %v952
    %v961 = vunpack.c.l.b16 %v953
    %v962 = vunpack.c.l.b16 %v954
    %v963 = vunpack.c.l.b16 %v955
    %v964 = vpack.c.b16 %v961, %v960
    %v965 = vpack.c.b16 %v963, %v962
    %v969 = vsel %vm591, %v950, 0
    %v972 = vsel %vm591, %v951, 0
    %974 = vmatprep.subr.bf16.mxu0 0
    %975 = vmatpush1.bf16.msra.mxu0 %v964
    %976 = vmatprep.subr.bf16.mxu0 0
    %977 = vmatpush1.bf16.msra.mxu0 %v965
    %978 = vmatprep.subr.bf16.mxu0 0
    %979 = vmatpush1.bf16.msra.mxu0 0
    %980 = vmatprep.subr.bf16.mxu0 0
    %981 = vmatpush1.bf16.msra.mxu0 0
    %982 = vmatprep.subr.bf16.mxu0 0
    %983 = vmatpush1.bf16.msra.mxu0 0
    %984 = vmatprep.subr.bf16.mxu0 0
    %985 = vmatpush1.bf16.msra.mxu0 0
    %986 = vmatprep.subr.bf16.mxu0 0
    %987 = vmatpush1.bf16.msra.mxu0 0
    %988 = vmatprep.subr.bf16.mxu0 0
    %989 = vmatpush1.bf16.msra.mxu0 0
    %990 = vmatprep.subr.bf16.mxu0 0
    %991 = vmatpush1.bf16.msra.mxu0 0
    %992 = vmatprep.subr.bf16.mxu0 0
    %993 = vmatpush1.bf16.msra.mxu0 0
    %994 = vmatprep.subr.bf16.mxu0 0
    %995 = vmatpush1.bf16.msra.mxu0 0
    %996 = vmatprep.subr.bf16.mxu0 0
    %997 = vmatpush1.bf16.msra.mxu0 0
    %998 = vmatprep.subr.bf16.mxu0 0
    %999 = vmatpush1.bf16.msra.mxu0 0
    %1000 = vmatprep.subr.bf16.mxu0 0
    %1001 = vmatpush1.bf16.msra.mxu0 0
    %1002 = vmatprep.subr.bf16.mxu0 0
    %1003 = vmatpush1.bf16.msra.mxu0 0
    %1004 = vmatprep.subr.bf16.mxu0 0
    %1005 = vmatpush1.bf16.msra.mxu0 0
    %1006 = vmatprep.mubr.bf16.mxu0 0
    %1007 = vmatmul.mubr.bf16.gmra.mrb[0].mxu0 %v969
    %v1008 = vpop.f32.mrb[0].mxu0
    %v1009 = vadd.f32 0.0, %v1008
    %v1010 = vpop.f32.mrb[0].mxu0
    %v1011 = vpop.f32.mrb[0].mxu0
    %v1012 = vadd.f32 0.0, %v1011
    %v1013 = vpop.f32.mrb[0].mxu0
    %1014 = vmatprep.mubr.bf16.mxu0 0
    %1015 = vmatmul.mubr.bf16.gmra.mrb[0].mxu0 %v972
    %v1016 = vpop.f32.mrb[0].mxu0
    %v1017 = vadd.f32 0.0, %v1016
    %v1018 = vpop.f32.mrb[0].mxu0
    %v1019 = vpop.f32.mrb[0].mxu0
    %v1020 = vadd.f32 0.0, %v1019
    %v1021 = vpop.f32.mrb[0].mxu0
    %1022 = vdwg.mxu0
    %v1027 = vunpack.c.l.b16 %v760
    %v1028 = vunpack.c.l.b16 %v761
    %v1029 = vunpack.c.l.b16 %v762
    %v1030 = vunpack.c.l.b16 %v763
    %v1031 = vpack.c.b16 %v1028, %v1027
    %v1032 = vpack.c.b16 %v1030, %v1029
    %v1036 = vsel %vm591, %v758, 0
    %v1039 = vsel %vm591, %v759, 0
    %1041 = vmatprep.subr.bf16.mxu0 0
    %1042 = vmatpush1.bf16.msra.mxu0 %v1031
    %1043 = vmatprep.subr.bf16.mxu0 0
    %1044 = vmatpush1.bf16.msra.mxu0 %v1032
    %1045 = vmatprep.subr.bf16.mxu0 0
    %1046 = vmatpush1.bf16.msra.mxu0 0
    %1047 = vmatprep.subr.bf16.mxu0 0
    %1048 = vmatpush1.bf16.msra.mxu0 0
    %1049 = vmatprep.subr.bf16.mxu0 0
    %1050 = vmatpush1.bf16.msra.mxu0 0
    %1051 = vmatprep.subr.bf16.mxu0 0
    %1052 = vmatpush1.bf16.msra.mxu0 0
    %1053 = vmatprep.subr.bf16.mxu0 0
    %1054 = vmatpush1.bf16.msra.mxu0 0
    %1055 = vmatprep.subr.bf16.mxu0 0
    %1056 = vmatpush1.bf16.msra.mxu0 0
    %1057 = vmatprep.subr.bf16.mxu0 0
    %1058 = vmatpush1.bf16.msra.mxu0 0
    %1059 = vmatprep.subr.bf16.mxu0 0
    %1060 = vmatpush1.bf16.msra.mxu0 0
    %1061 = vmatprep.subr.bf16.mxu0 0
    %1062 = vmatpush1.bf16.msra.mxu0 0
    %1063 = vmatprep.subr.bf16.mxu0 0
    %1064 = vmatpush1.bf16.msra.mxu0 0
    %1065 = vmatprep.subr.bf16.mxu0 0
    %1066 = vmatpush1.bf16.msra.mxu0 0
    %1067 = vmatprep.subr.bf16.mxu0 0
    %1068 = vmatpush1.bf16.msra.mxu0 0
    %1069 = vmatprep.subr.bf16.mxu0 0
    %1070 = vmatpush1.bf16.msra.mxu0 0
    %1071 = vmatprep.subr.bf16.mxu0 0
    %1072 = vmatpush1.bf16.msra.mxu0 0
    %1073 = vmatprep.mubr.bf16.mxu0 0
    %1074 = vmatmul.mubr.bf16.gmra.mrb[0].mxu0 %v1036
    %v1075 = vpop.f32.mrb[0].mxu0
    %v1076 = vadd.f32 %v1009, %v1075
    %v1077 = vpop.f32.mrb[0].mxu0
    %v1078 = vpop.f32.mrb[0].mxu0
    %v1079 = vadd.f32 %v1012, %v1078
    %v1080 = vpop.f32.mrb[0].mxu0
    %1081 = vmatprep.mubr.bf16.mxu0 0
    %1082 = vmatmul.mubr.bf16.gmra.mrb[0].mxu0 %v1039
    %v1083 = vpop.f32.mrb[0].mxu0
    %v1084 = vadd.f32 %v1017, %v1083
    %v1085 = vpop.f32.mrb[0].mxu0
    %v1086 = vpop.f32.mrb[0].mxu0
    %v1087 = vadd.f32 %v1020, %v1086
    %v1088 = vpop.f32.mrb[0].mxu0
    %1089 = vdwg.mxu0
    %1090 = vrot.lane.b32.xlu0 %v585, 64
    %v1091 = vpop.permute.xlu0 %1090
    %1092 = vrot.lane.b32.xlu0 %v586, 64
    %v1093 = vpop.permute.xlu0 %1092
    %1094 = vrot.lane.b32.xlu0 %v587, 64
    %v1095 = vpop.permute.xlu0 %1094
    %1096 = vrot.lane.b32.xlu0 %v588, 64
    %v1097 = vpop.permute.xlu0 %1096
    %v1099 = vsel %vm591, %v1091, 0
    %v1102 = vsel %vm591, %v1093, 0
    %v1105 = vsel %vm591, %v1095, 0
    %v1108 = vsel %vm591, %v1097, 0
    %1110 = vmatprep.subr.bf16.mxu0 0
    %1111 = vmatpush1.bf16.xpose.msra.mxu0 %v1105
    %1112 = vmatprep.subr.bf16.mxu0 0
    %1113 = vmatpush1.bf16.xpose.msra.mxu0 %v1108
    %1114 = vmatprep.subr.bf16.mxu0 0
    %1115 = vmatpush1.bf16.xpose.msra.mxu0 0
    %1116 = vmatprep.subr.bf16.mxu0 0
    %1117 = vmatpush1.bf16.xpose.msra.mxu0 0
    %1118 = vmatprep.subr.bf16.mxu0 0
    %1119 = vmatpush1.bf16.xpose.msra.mxu0 0
    %1120 = vmatprep.subr.bf16.mxu0 0
    %1121 = vmatpush1.bf16.xpose.msra.mxu0 0
    %1122 = vmatprep.subr.bf16.mxu0 0
    %1123 = vmatpush1.bf16.xpose.msra.mxu0 0
    %1124 = vmatprep.subr.bf16.mxu0 0
    %1125 = vmatpush1.bf16.xpose.msra.mxu0 0
    %1126 = vmatprep.subr.bf16.mxu0 0
    %1127 = vmatpush1.bf16.xpose.msra.mxu0 0
    %1128 = vmatprep.subr.bf16.mxu0 0
    %1129 = vmatpush1.bf16.xpose.msra.mxu0 0
    %1130 = vmatprep.subr.bf16.mxu0 0
    %1131 = vmatpush1.bf16.xpose.msra.mxu0 0
    %1132 = vmatprep.subr.bf16.mxu0 0
    %1133 = vmatpush1.bf16.xpose.msra.mxu0 0
    %1134 = vmatprep.subr.bf16.mxu0 0
    %1135 = vmatpush1.bf16.xpose.msra.mxu0 0
    %1136 = vmatprep.subr.bf16.mxu0 0
    %1137 = vmatpush1.bf16.xpose.msra.mxu0 0
    %1138 = vmatprep.subr.bf16.mxu0 0
    %1139 = vmatpush1.bf16.xpose.msra.mxu0 0
    %1140 = vmatprep.subr.bf16.mxu0 0
    %1141 = vmatpush1.bf16.xpose.msra.mxu0 0
    %1142 = vmatprep.mubr.bf16.mxu0 0
    %1143 = vmatmul.mubr.bf16.gmra.mrb[0].mxu0 %v1099
    %v1144 = vpop.f32.mrb[0].mxu0
    %v1145 = vadd.f32 0.0, %v1144
    %v1146 = vpop.f32.mrb[0].mxu0
    %v1147 = vpop.f32.mrb[0].mxu0
    %v1148 = vadd.f32 0.0, %v1147
    %v1149 = vpop.f32.mrb[0].mxu0
    %1150 = vmatprep.mubr.bf16.mxu0 0
    %1151 = vmatmul.mubr.bf16.gmra.mrb[0].mxu0 %v1102
    %v1152 = vpop.f32.mrb[0].mxu0
    %v1153 = vadd.f32 0.0, %v1152
    %v1154 = vpop.f32.mrb[0].mxu0
    %v1155 = vpop.f32.mrb[0].mxu0
    %v1156 = vadd.f32 0.0, %v1155
    %v1157 = vpop.f32.mrb[0].mxu0
    %1158 = vdwg.mxu0
    %v1159 = vsel %vm581, %v1145, -inf
    %v1160 = vsel %vm582, %v1148, -inf
    %v1161 = vsel %vm583, %v1153, -inf
    %v1162 = vsel %vm584, %v1156, -inf
    %v1163 = vsel %vm591, %v1159, -inf
    %1164 = vmax.xlane.f32.xlu0 %v1163
    %v1165 = vpop.xlane.xlu0 %1164
    %v1166 = vsel %vm591, %v1160, -inf
    %1167 = vmax.xlane.f32.xlu0 %v1166
    %v1168 = vpop.xlane.xlu0 %1167
    %v1169 = vsel %vm591, %v1161, -inf
    %1170 = vmax.xlane.f32.xlu0 %v1169
    %v1171 = vpop.xlane.xlu0 %1170
    %v1172 = vsel %vm591, %v1162, -inf
    %1173 = vmax.xlane.f32.xlu0 %v1172
    %v1174 = vpop.xlane.xlu0 %1173
    %v1175 = vsub.f32 %v1159, %v1165
    %v1176 = vsub.f32 %v1160, %v1168
    %v1177 = vsub.f32 %v1161, %v1171
    %v1178 = vsub.f32 %v1162, %v1174
    %v1179 = vmul.f32 %v1175, 1.442695
    %v1180 = vpow.pop %v1179
    %v1181 = vmul.f32 %v1176, 1.442695
    %v1182 = vpow.pop %v1181
    %v1183 = vmul.f32 %v1177, 1.442695
    %v1184 = vpow.pop %v1183
    %v1185 = vmul.f32 %v1178, 1.442695
    %v1186 = vpow.pop %v1185
    %v1187 = vsel %vm591, %v1180, 0.0
    %1188 = vadd.xlane.f32.xlu0 %v1187
    %v1189 = vpop.xlane.xlu0 %1188
    %v1190 = vsel %vm591, %v1182, 0.0
    %1191 = vadd.xlane.f32.xlu0 %v1190
    %v1192 = vpop.xlane.xlu0 %1191
    %v1193 = vsel %vm591, %v1184, 0.0
    %1194 = vadd.xlane.f32.xlu0 %v1193
    %v1195 = vpop.xlane.xlu0 %1194
    %v1196 = vsel %vm591, %v1186, 0.0
    %1197 = vadd.xlane.f32.xlu0 %v1196
    %v1198 = vpop.xlane.xlu0 %1197
    %v1199 = vrcp.pop %v1189
    %v1200 = vrcp.pop %v1192
    %v1201 = vrcp.pop %v1195
    %v1202 = vrcp.pop %v1198
    %v1203 = vmul.f32 %v1180, %v1199
    %v1204 = vmul.f32 %v1182, %v1200
    %v1205 = vmul.f32 %v1184, %v1201
    %v1206 = vmul.f32 %v1186, %v1202
    %v1207 = vpack.c.bf16 %v1204, %v1203
    %v1208 = vpack.c.bf16 %v1206, %v1205
    %1209 = vrot.lane.b32.xlu0 %v589, 64
    %v1210 = vpop.permute.xlu0 %1209
    %1211 = vrot.lane.b32.xlu0 %v590, 64
    %v1212 = vpop.permute.xlu0 %1211
    %v1216 = vsel %vm591, %v1207, 0
    %v1219 = vsel %vm591, %v1208, 0
    %1221 = vmatprep.subr.bf16.mxu0 0
    %1222 = vmatpush1.bf16.msra.mxu0 %v1210
    %1223 = vmatprep.subr.bf16.mxu0 0
    %1224 = vmatpush1.bf16.msra.mxu0 %v1212
    %1225 = vmatprep.subr.bf16.mxu0 0
    %1226 = vmatpush1.bf16.msra.mxu0 0
    %1227 = vmatprep.subr.bf16.mxu0 0
    %1228 = vmatpush1.bf16.msra.mxu0 0
    %1229 = vmatprep.subr.bf16.mxu0 0
    %1230 = vmatpush1.bf16.msra.mxu0 0
    %1231 = vmatprep.subr.bf16.mxu0 0
    %1232 = vmatpush1.bf16.msra.mxu0 0
    %1233 = vmatprep.subr.bf16.mxu0 0
    %1234 = vmatpush1.bf16.msra.mxu0 0
    %1235 = vmatprep.subr.bf16.mxu0 0
    %1236 = vmatpush1.bf16.msra.mxu0 0
    %1237 = vmatprep.subr.bf16.mxu0 0
    %1238 = vmatpush1.bf16.msra.mxu0 0
    %1239 = vmatprep.subr.bf16.mxu0 0
    %1240 = vmatpush1.bf16.msra.mxu0 0
    %1241 = vmatprep.subr.bf16.mxu0 0
    %1242 = vmatpush1.bf16.msra.mxu0 0
    %1243 = vmatprep.subr.bf16.mxu0 0
    %1244 = vmatpush1.bf16.msra.mxu0 0
    %1245 = vmatprep.subr.bf16.mxu0 0
    %1246 = vmatpush1.bf16.msra.mxu0 0
    %1247 = vmatprep.subr.bf16.mxu0 0
    %1248 = vmatpush1.bf16.msra.mxu0 0
    %1249 = vmatprep.subr.bf16.mxu0 0
    %1250 = vmatpush1.bf16.msra.mxu0 0
    %1251 = vmatprep.subr.bf16.mxu0 0
    %1252 = vmatpush1.bf16.msra.mxu0 0
    %1253 = vmatprep.mubr.bf16.mxu0 0
    %1254 = vmatmul.mubr.bf16.gmra.mrb[0].mxu0 %v1216
    %v1255 = vpop.f32.mrb[0].mxu0
    %v1256 = vadd.f32 0.0, %v1255
    %v1257 = vpop.f32.mrb[0].mxu0
    %v1258 = vpop.f32.mrb[0].mxu0
    %v1259 = vadd.f32 0.0, %v1258
    %v1260 = vpop.f32.mrb[0].mxu0
    %1261 = vmatprep.mubr.bf16.mxu0 0
    %1262 = vmatmul.mubr.bf16.gmra.mrb[0].mxu0 %v1219
    %v1263 = vpop.f32.mrb[0].mxu0
    %v1264 = vadd.f32 0.0, %v1263
    %v1265 = vpop.f32.mrb[0].mxu0
    %v1266 = vpop.f32.mrb[0].mxu0
    %v1267 = vadd.f32 0.0, %v1266
    %v1268 = vpop.f32.mrb[0].mxu0
    %1269 = vdwg.mxu0
    %v1270 = vpack.c.bf16 %v1259, %v1256
    %v1271 = vpack.c.bf16 %v1267, %v1264
    %v1272 = vld [vmem:[#allocation11 + $0x20] sm:$0xf]
    %v1273 = vld [vmem:[#allocation11 + $0x24] sm:$0xf]
    %v1274 = vld [vmem:[#allocation11 + $0x28] sm:$0xf]
    %v1275 = vld [vmem:[#allocation11 + $0x2c] sm:$0xf]
    %v1280 = vunpack.c.l.b16 %v1272
    %v1281 = vunpack.c.l.b16 %v1273
    %v1282 = vunpack.c.l.b16 %v1274
    %v1283 = vunpack.c.l.b16 %v1275
    %v1284 = vpack.c.b16 %v1281, %v1280
    %v1285 = vpack.c.b16 %v1283, %v1282
    %v1289 = vsel %vm591, %v1270, 0
    %v1292 = vsel %vm591, %v1271, 0
    %1294 = vmatprep.subr.bf16.mxu0 0
    %1295 = vmatpush1.bf16.msra.mxu0 %v1284
    %1296 = vmatprep.subr.bf16.mxu0 0
    %1297 = vmatpush1.bf16.msra.mxu0 %v1285
    %1298 = vmatprep.subr.bf16.mxu0 0
    %1299 = vmatpush1.bf16.msra.mxu0 0
    %1300 = vmatprep.subr.bf16.mxu0 0
    %1301 = vmatpush1.bf16.msra.mxu0 0
    %1302 = vmatprep.subr.bf16.mxu0 0
    %1303 = vmatpush1.bf16.msra.mxu0 0
    %1304 = vmatprep.subr.bf16.mxu0 0
    %1305 = vmatpush1.bf16.msra.mxu0 0
    %1306 = vmatprep.subr.bf16.mxu0 0
    %1307 = vmatpush1.bf16.msra.mxu0 0
    %1308 = vmatprep.subr.bf16.mxu0 0
    %1309 = vmatpush1.bf16.msra.mxu0 0
    %1310 = vmatprep.subr.bf16.mxu0 0
    %1311 = vmatpush1.bf16.msra.mxu0 0
    %1312 = vmatprep.subr.bf16.mxu0 0
    %1313 = vmatpush1.bf16.msra.mxu0 0
    %1314 = vmatprep.subr.bf16.mxu0 0
    %1315 = vmatpush1.bf16.msra.mxu0 0
    %1316 = vmatprep.subr.bf16.mxu0 0
    %1317 = vmatpush1.bf16.msra.mxu0 0
    %1318 = vmatprep.subr.bf16.mxu0 0
    %1319 = vmatpush1.bf16.msra.mxu0 0
    %1320 = vmatprep.subr.bf16.mxu0 0
    %1321 = vmatpush1.bf16.msra.mxu0 0
    %1322 = vmatprep.subr.bf16.mxu0 0
    %1323 = vmatpush1.bf16.msra.mxu0 0
    %1324 = vmatprep.subr.bf16.mxu0 0
    %1325 = vmatpush1.bf16.msra.mxu0 0
    %1326 = vmatprep.mubr.bf16.mxu0 0
    %1327 = vmatmul.mubr.bf16.gmra.mrb[0].mxu0 %v1289
    %v1328 = vpop.f32.mrb[0].mxu0
    %v1329 = vadd.f32 0.0, %v1328
    %v1330 = vpop.f32.mrb[0].mxu0
    %v1331 = vpop.f32.mrb[0].mxu0
    %v1332 = vadd.f32 0.0, %v1331
    %v1333 = vpop.f32.mrb[0].mxu0
    %1334 = vmatprep.mubr.bf16.mxu0 0
    %1335 = vmatmul.mubr.bf16.gmra.mrb[0].mxu0 %v1292
    %v1336 = vpop.f32.mrb[0].mxu0
    %v1337 = vadd.f32 0.0, %v1336
    %v1338 = vpop.f32.mrb[0].mxu0
    %v1339 = vpop.f32.mrb[0].mxu0
    %v1340 = vadd.f32 0.0, %v1339
    %v1341 = vpop.f32.mrb[0].mxu0
    %1342 = vdwg.mxu0
    %v1343 = vadd.f32 %v1076, %v1329
    %v1344 = vadd.f32 %v1079, %v1332
    %v1345 = vadd.f32 %v1084, %v1337
    %v1346 = vadd.f32 %v1087, %v1340
    %1347 = vrot.lane.b32.xlu0 %v585, 32
    %v1348 = vpop.permute.xlu0 %1347
    %1349 = vrot.lane.b32.xlu0 %v586, 32
    %v1350 = vpop.permute.xlu0 %1349
    %1351 = vrot.lane.b32.xlu0 %v587, 32
    %v1352 = vpop.permute.xlu0 %1351
    %1353 = vrot.lane.b32.xlu0 %v588, 32
    %v1354 = vpop.permute.xlu0 %1353
    %v1356 = vsel %vm591, %v1348, 0
    %v1359 = vsel %vm591, %v1350, 0
    %v1362 = vsel %vm591, %v1352, 0
    %v1365 = vsel %vm591, %v1354, 0
    %1367 = vmatprep.subr.bf16.mxu0 0
    %1368 = vmatpush1.bf16.xpose.msra.mxu0 %v1362
    %1369 = vmatprep.subr.bf16.mxu0 0
    %1370 = vmatpush1.bf16.xpose.msra.mxu0 %v1365
    %1371 = vmatprep.subr.bf16.mxu0 0
    %1372 = vmatpush1.bf16.xpose.msra.mxu0 0
    %1373 = vmatprep.subr.bf16.mxu0 0
    %1374 = vmatpush1.bf16.xpose.msra.mxu0 0
    %1375 = vmatprep.subr.bf16.mxu0 0
    %1376 = vmatpush1.bf16.xpose.msra.mxu0 0
    %1377 = vmatprep.subr.bf16.mxu0 0
    %1378 = vmatpush1.bf16.xpose.msra.mxu0 0
    %1379 = vmatprep.subr.bf16.mxu0 0
    %1380 = vmatpush1.bf16.xpose.msra.mxu0 0
    %1381 = vmatprep.subr.bf16.mxu0 0
    %1382 = vmatpush1.bf16.xpose.msra.mxu0 0
    %1383 = vmatprep.subr.bf16.mxu0 0
    %1384 = vmatpush1.bf16.xpose.msra.mxu0 0
    %1385 = vmatprep.subr.bf16.mxu0 0
    %1386 = vmatpush1.bf16.xpose.msra.mxu0 0
    %1387 = vmatprep.subr.bf16.mxu0 0
    %1388 = vmatpush1.bf16.xpose.msra.mxu0 0
    %1389 = vmatprep.subr.bf16.mxu0 0
    %1390 = vmatpush1.bf16.xpose.msra.mxu0 0
    %1391 = vmatprep.subr.bf16.mxu0 0
    %1392 = vmatpush1.bf16.xpose.msra.mxu0 0
    %1393 = vmatprep.subr.bf16.mxu0 0
    %1394 = vmatpush1.bf16.xpose.msra.mxu0 0
    %1395 = vmatprep.subr.bf16.mxu0 0
    %1396 = vmatpush1.bf16.xpose.msra.mxu0 0
    %1397 = vmatprep.subr.bf16.mxu0 0
    %1398 = vmatpush1.bf16.xpose.msra.mxu0 0
    %1399 = vmatprep.mubr.bf16.mxu0 0
    %1400 = vmatmul.mubr.bf16.gmra.mrb[0].mxu0 %v1356
    %v1401 = vpop.f32.mrb[0].mxu0
    %v1402 = vadd.f32 0.0, %v1401
    %v1403 = vpop.f32.mrb[0].mxu0
    %v1404 = vpop.f32.mrb[0].mxu0
    %v1405 = vadd.f32 0.0, %v1404
    %v1406 = vpop.f32.mrb[0].mxu0
    %1407 = vmatprep.mubr.bf16.mxu0 0
    %1408 = vmatmul.mubr.bf16.gmra.mrb[0].mxu0 %v1359
    %v1409 = vpop.f32.mrb[0].mxu0
    %v1410 = vadd.f32 0.0, %v1409
    %v1411 = vpop.f32.mrb[0].mxu0
    %v1412 = vpop.f32.mrb[0].mxu0
    %v1413 = vadd.f32 0.0, %v1412
    %v1414 = vpop.f32.mrb[0].mxu0
    %1415 = vdwg.mxu0
    %v1416 = vsel %vm581, %v1402, -inf
    %v1417 = vsel %vm582, %v1405, -inf
    %v1418 = vsel %vm583, %v1410, -inf
    %v1419 = vsel %vm584, %v1413, -inf
    %v1420 = vsel %vm591, %v1416, -inf
    %1421 = vmax.xlane.f32.xlu0 %v1420
    %v1422 = vpop.xlane.xlu0 %1421
    %v1423 = vsel %vm591, %v1417, -inf
    %1424 = vmax.xlane.f32.xlu0 %v1423
    %v1425 = vpop.xlane.xlu0 %1424
    %v1426 = vsel %vm591, %v1418, -inf
    %1427 = vmax.xlane.f32.xlu0 %v1426
    %v1428 = vpop.xlane.xlu0 %1427
    %v1429 = vsel %vm591, %v1419, -inf
    %1430 = vmax.xlane.f32.xlu0 %v1429
    %v1431 = vpop.xlane.xlu0 %1430
    %v1432 = vsub.f32 %v1416, %v1422
    %v1433 = vsub.f32 %v1417, %v1425
    %v1434 = vsub.f32 %v1418, %v1428
    %v1435 = vsub.f32 %v1419, %v1431
    %v1436 = vmul.f32 %v1432, 1.442695
    %v1437 = vpow.pop %v1436
    %v1438 = vmul.f32 %v1433, 1.442695
    %v1439 = vpow.pop %v1438
    %v1440 = vmul.f32 %v1434, 1.442695
    %v1441 = vpow.pop %v1440
    %v1442 = vmul.f32 %v1435, 1.442695
    %v1443 = vpow.pop %v1442
    %v1444 = vsel %vm591, %v1437, 0.0
    %1445 = vadd.xlane.f32.xlu0 %v1444
    %v1446 = vpop.xlane.xlu0 %1445
    %v1447 = vsel %vm591, %v1439, 0.0
    %1448 = vadd.xlane.f32.xlu0 %v1447
    %v1449 = vpop.xlane.xlu0 %1448
    %v1450 = vsel %vm591, %v1441, 0.0
    %1451 = vadd.xlane.f32.xlu0 %v1450
    %v1452 = vpop.xlane.xlu0 %1451
    %v1453 = vsel %vm591, %v1443, 0.0
    %1454 = vadd.xlane.f32.xlu0 %v1453
    %v1455 = vpop.xlane.xlu0 %1454
    %v1456 = vrcp.pop %v1446
    %v1457 = vrcp.pop %v1449
    %v1458 = vrcp.pop %v1452
    %v1459 = vrcp.pop %v1455
    %v1460 = vmul.f32 %v1437, %v1456
    %v1461 = vmul.f32 %v1439, %v1457
    %v1462 = vmul.f32 %v1441, %v1458
    %v1463 = vmul.f32 %v1443, %v1459
    %v1464 = vpack.c.bf16 %v1461, %v1460
    %v1465 = vpack.c.bf16 %v1463, %v1462
    %1466 = vrot.lane.b32.xlu0 %v589, 32
    %v1467 = vpop.permute.xlu0 %1466
    %1468 = vrot.lane.b32.xlu0 %v590, 32
    %v1469 = vpop.permute.xlu0 %1468
    %v1473 = vsel %vm591, %v1464, 0
    %v1476 = vsel %vm591, %v1465, 0
    %1478 = vmatprep.subr.bf16.mxu0 0
    %1479 = vmatpush1.bf16.msra.mxu0 %v1467
    %1480 = vmatprep.subr.bf16.mxu0 0
    %1481 = vmatpush1.bf16.msra.mxu0 %v1469
    %1482 = vmatprep.subr.bf16.mxu0 0
    %1483 = vmatpush1.bf16.msra.mxu0 0
    %1484 = vmatprep.subr.bf16.mxu0 0
    %1485 = vmatpush1.bf16.msra.mxu0 0
    %1486 = vmatprep.subr.bf16.mxu0 0
    %1487 = vmatpush1.bf16.msra.mxu0 0
    %1488 = vmatprep.subr.bf16.mxu0 0
    %1489 = vmatpush1.bf16.msra.mxu0 0
    %1490 = vmatprep.subr.bf16.mxu0 0
    %1491 = vmatpush1.bf16.msra.mxu0 0
    %1492 = vmatprep.subr.bf16.mxu0 0
    %1493 = vmatpush1.bf16.msra.mxu0 0
    %1494 = vmatprep.subr.bf16.mxu0 0
    %1495 = vmatpush1.bf16.msra.mxu0 0
    %1496 = vmatprep.subr.bf16.mxu0 0
    %1497 = vmatpush1.bf16.msra.mxu0 0
    %1498 = vmatprep.subr.bf16.mxu0 0
    %1499 = vmatpush1.bf16.msra.mxu0 0
    %1500 = vmatprep.subr.bf16.mxu0 0
    %1501 = vmatpush1.bf16.msra.mxu0 0
    %1502 = vmatprep.subr.bf16.mxu0 0
    %1503 = vmatpush1.bf16.msra.mxu0 0
    %1504 = vmatprep.subr.bf16.mxu0 0
    %1505 = vmatpush1.bf16.msra.mxu0 0
    %1506 = vmatprep.subr.bf16.mxu0 0
    %1507 = vmatpush1.bf16.msra.mxu0 0
    %1508 = vmatprep.subr.bf16.mxu0 0
    %1509 = vmatpush1.bf16.msra.mxu0 0
    %1510 = vmatprep.mubr.bf16.mxu0 0
    %1511 = vmatmul.mubr.bf16.gmra.mrb[0].mxu0 %v1473
    %v1512 = vpop.f32.mrb[0].mxu0
    %v1513 = vadd.f32 0.0, %v1512
    %v1514 = vpop.f32.mrb[0].mxu0
    %v1515 = vpop.f32.mrb[0].mxu0
    %v1516 = vadd.f32 0.0, %v1515
    %v1517 = vpop.f32.mrb[0].mxu0
    %1518 = vmatprep.mubr.bf16.mxu0 0
    %1519 = vmatmul.mubr.bf16.gmra.mrb[0].mxu0 %v1476
    %v1520 = vpop.f32.mrb[0].mxu0
    %v1521 = vadd.f32 0.0, %v1520
    %v1522 = vpop.f32.mrb[0].mxu0
    %v1523 = vpop.f32.mrb[0].mxu0
    %v1524 = vadd.f32 0.0, %v1523
    %v1525 = vpop.f32.mrb[0].mxu0
    %1526 = vdwg.mxu0
    %v1527 = vpack.c.bf16 %v1516, %v1513
    %v1528 = vpack.c.bf16 %v1524, %v1521
    %v1529 = vld [vmem:[#allocation11 + $0x30] sm:$0xf]
    %v1530 = vld [vmem:[#allocation11 + $0x34] sm:$0xf]
    %v1531 = vld [vmem:[#allocation11 + $0x38] sm:$0xf]
    %v1532 = vld [vmem:[#allocation11 + $0x3c] sm:$0xf]
    %v1537 = vunpack.c.l.b16 %v1529
    %v1538 = vunpack.c.l.b16 %v1530
    %v1539 = vunpack.c.l.b16 %v1531
    %v1540 = vunpack.c.l.b16 %v1532
    %v1541 = vpack.c.b16 %v1538, %v1537
    %v1542 = vpack.c.b16 %v1540, %v1539
    %v1546 = vsel %vm591, %v1527, 0
    %v1549 = vsel %vm591, %v1528, 0
    %1551 = vmatprep.subr.bf16.mxu0 0
    %1552 = vmatpush1.bf16.msra.mxu0 %v1541
    %1553 = vmatprep.subr.bf16.mxu0 0
    %1554 = vmatpush1.bf16.msra.mxu0 %v1542
    %1555 = vmatprep.subr.bf16.mxu0 0
    %1556 = vmatpush1.bf16.msra.mxu0 0
    %1557 = vmatprep.subr.bf16.mxu0 0
    %1558 = vmatpush1.bf16.msra.mxu0 0
    %1559 = vmatprep.subr.bf16.mxu0 0
    %1560 = vmatpush1.bf16.msra.mxu0 0
    %1561 = vmatprep.subr.bf16.mxu0 0
    %1562 = vmatpush1.bf16.msra.mxu0 0
    %1563 = vmatprep.subr.bf16.mxu0 0
    %1564 = vmatpush1.bf16.msra.mxu0 0
    %1565 = vmatprep.subr.bf16.mxu0 0
    %1566 = vmatpush1.bf16.msra.mxu0 0
    %1567 = vmatprep.subr.bf16.mxu0 0
    %1568 = vmatpush1.bf16.msra.mxu0 0
    %1569 = vmatprep.subr.bf16.mxu0 0
    %1570 = vmatpush1.bf16.msra.mxu0 0
    %1571 = vmatprep.subr.bf16.mxu0 0
    %1572 = vmatpush1.bf16.msra.mxu0 0
    %1573 = vmatprep.subr.bf16.mxu0 0
    %1574 = vmatpush1.bf16.msra.mxu0 0
    %1575 = vmatprep.subr.bf16.mxu0 0
    %1576 = vmatpush1.bf16.msra.mxu0 0
    %1577 = vmatprep.subr.bf16.mxu0 0
    %1578 = vmatpush1.bf16.msra.mxu0 0
    %1579 = vmatprep.subr.bf16.mxu0 0
    %1580 = vmatpush1.bf16.msra.mxu0 0
    %1581 = vmatprep.subr.bf16.mxu0 0
    %1582 = vmatpush1.bf16.msra.mxu0 0
    %1583 = vmatprep.mubr.bf16.mxu0 0
    %1584 = vmatmul.mubr.bf16.gmra.mrb[0].mxu0 %v1546
    %v1585 = vpop.f32.mrb[0].mxu0
    %v1586 = vadd.f32 0.0, %v1585
    %v1587 = vpop.f32.mrb[0].mxu0
    %v1588 = vpop.f32.mrb[0].mxu0
    %v1589 = vadd.f32 0.0, %v1588
    %v1590 = vpop.f32.mrb[0].mxu0
    %1591 = vmatprep.mubr.bf16.mxu0 0
    %1592 = vmatmul.mubr.bf16.gmra.mrb[0].mxu0 %v1549
    %v1593 = vpop.f32.mrb[0].mxu0
    %v1594 = vadd.f32 0.0, %v1593
    %v1595 = vpop.f32.mrb[0].mxu0
    %v1596 = vpop.f32.mrb[0].mxu0
    %v1597 = vadd.f32 0.0, %v1596
    %v1598 = vpop.f32.mrb[0].mxu0
    %1599 = vdwg.mxu0
    %v1600 = vadd.f32 %v1343, %v1586
    %v1601 = vadd.f32 %v1344, %v1589
    %v1602 = vadd.f32 %v1345, %v1594
    %v1603 = vadd.f32 %v1346, %v1597
    %v1604 = vld [vmem:[%s8] sm:$0x1]
    %v1606 = vlaneseq
    %v1607 = vshrl.u32 %v1606, 7
    %v1608 = vsub.s32 0, %v1607
    %v1609 = vrot.slane %v1604, %v1608
    %v1611 = vadd.f32 %v1600, %v1609
    %v1612 = vadd.f32 %v1601, %v1609
    %v1613 = vadd.f32 %v1602, %v1609
    %v1614 = vadd.f32 %v1603, %v1609
    %v1615 = vadd.f32 %v161, %v1611
    %v1616 = vadd.f32 %v162, %v1612
    %v1617 = vadd.f32 %v163, %v1613
    %v1618 = vadd.f32 %v164, %v1614
    %v1619 = vld [vmem:[%s9] sm:$0x1]
    %v1620 = vld [vmem:[%s10] sm:$0x1]
    %1621 = vadd.xlane.f32.xlu0 %v1615
    %v1622 = vpop.xlane.xlu0 %1621
    %1623 = vadd.xlane.f32.xlu0 %v1616
    %v1624 = vpop.xlane.xlu0 %1623
    %1625 = vadd.xlane.f32.xlu0 %v1617
    %v1626 = vpop.xlane.xlu0 %1625
    %1627 = vadd.xlane.f32.xlu0 %v1618
    %v1628 = vpop.xlane.xlu0 %1627
    %v1629 = vmul.f32 %v1622, %v175
    %v1630 = vmul.f32 %v1624, %v175
    %v1631 = vmul.f32 %v1626, %v175
    %v1632 = vmul.f32 %v1628, %v175
    %v1633 = vsub.f32 %v1615, %v1629
    %v1634 = vsub.f32 %v1616, %v1630
    %v1635 = vsub.f32 %v1617, %v1631
    %v1636 = vsub.f32 %v1618, %v1632
    %v1637 = vmul.f32 %v1633, %v1633
    %v1638 = vmul.f32 %v1634, %v1634
    %v1639 = vmul.f32 %v1635, %v1635
    %v1640 = vmul.f32 %v1636, %v1636
    %1641 = vadd.xlane.f32.xlu0 %v1637
    %v1642 = vpop.xlane.xlu0 %1641
    %1643 = vadd.xlane.f32.xlu0 %v1638
    %v1644 = vpop.xlane.xlu0 %1643
    %1645 = vadd.xlane.f32.xlu0 %v1639
    %v1646 = vpop.xlane.xlu0 %1645
    %1647 = vadd.xlane.f32.xlu0 %v1640
    %v1648 = vpop.xlane.xlu0 %1647
    %v1649 = vmul.f32 %v1642, %v175
    %v1650 = vmul.f32 %v1644, %v175
    %v1651 = vmul.f32 %v1646, %v175
    %v1652 = vmul.f32 %v1648, %v175
    %v1653 = vadd.f32 %v1649, 1e-05
    %v1654 = vadd.f32 %v1650, 1e-05
    %v1655 = vadd.f32 %v1651, 1e-05
    %v1656 = vadd.f32 %v1652, 1e-05
    %v1657 = vrsqrt.pop %v1653
    %v1658 = vrsqrt.pop %v1654
    %v1659 = vrsqrt.pop %v1655
    %v1660 = vrsqrt.pop %v1656
    %v1661 = vmul.f32 %v1633, %v1657
    %v1662 = vmul.f32 %v1634, %v1658
    %v1663 = vmul.f32 %v1635, %v1659
    %v1664 = vmul.f32 %v1636, %v1660
    %v1666 = vlaneseq
    %v1667 = vshrl.u32 %v1666, 7
    %v1668 = vsub.s32 0, %v1667
    %v1669 = vrot.slane %v1619, %v1668
    %v1671 = vmul.f32 %v1661, %v1669
    %v1672 = vmul.f32 %v1662, %v1669
    %v1673 = vmul.f32 %v1663, %v1669
    %v1674 = vmul.f32 %v1664, %v1669
    %v1676 = vlaneseq
    %v1677 = vshrl.u32 %v1676, 7
    %v1678 = vsub.s32 0, %v1677
    %v1679 = vrot.slane %v1620, %v1678
    %v1681 = vadd.f32 %v1671, %v1679
    %v1682 = vadd.f32 %v1672, %v1679
    %v1683 = vadd.f32 %v1673, %v1679
    %v1684 = vadd.f32 %v1674, %v1679
    %v1685 = vpack.c.bf16 %v1682, %v1681
    %v1686 = vpack.c.bf16 %v1684, %v1683
    %v1687 = vld [vmem:[#allocation13] sm:$0xff]
    %v1688 = vld [vmem:[#allocation13 + $0x8] sm:$0xff]
    %v1689 = vld [vmem:[#allocation13 + $0x10] sm:$0xff]
    %v1690 = vld [vmem:[#allocation13 + $0x18] sm:$0xff]
    %v1691 = vld [vmem:[#allocation13 + $0x20] sm:$0xff]
    %v1692 = vld [vmem:[#allocation13 + $0x28] sm:$0xff]
    %v1693 = vld [vmem:[#allocation13 + $0x30] sm:$0xff]
    %v1694 = vld [vmem:[#allocation13 + $0x38] sm:$0xff]
    %v1695 = vld [vmem:[#allocation13 + $0x40] sm:$0xff]
    %v1696 = vld [vmem:[#allocation13 + $0x48] sm:$0xff]
    %v1697 = vld [vmem:[#allocation13 + $0x50] sm:$0xff]
    %v1698 = vld [vmem:[#allocation13 + $0x58] sm:$0xff]
    %v1699 = vld [vmem:[#allocation13 + $0x60] sm:$0xff]
    %v1700 = vld [vmem:[#allocation13 + $0x68] sm:$0xff]
    %v1701 = vld [vmem:[#allocation13 + $0x70] sm:$0xff]
    %v1702 = vld [vmem:[#allocation13 + $0x78] sm:$0xff]
    %v1703 = vld [vmem:[#allocation13 + $0x80] sm:$0xff]
    %v1704 = vld [vmem:[#allocation13 + $0x88] sm:$0xff]
    %v1705 = vld [vmem:[#allocation13 + $0x90] sm:$0xff]
    %v1706 = vld [vmem:[#allocation13 + $0x98] sm:$0xff]
    %v1707 = vld [vmem:[#allocation13 + $0xa0] sm:$0xff]
    %v1708 = vld [vmem:[#allocation13 + $0xa8] sm:$0xff]
    %v1709 = vld [vmem:[#allocation13 + $0xb0] sm:$0xff]
    %v1710 = vld [vmem:[#allocation13 + $0xb8] sm:$0xff]
    %v1711 = vld [vmem:[#allocation13 + $0xc0] sm:$0xff]
    %v1712 = vld [vmem:[#allocation13 + $0xc8] sm:$0xff]
    %v1713 = vld [vmem:[#allocation13 + $0xd0] sm:$0xff]
    %v1714 = vld [vmem:[#allocation13 + $0xd8] sm:$0xff]
    %v1715 = vld [vmem:[#allocation13 + $0xe0] sm:$0xff]
    %v1716 = vld [vmem:[#allocation13 + $0xe8] sm:$0xff]
    %v1717 = vld [vmem:[#allocation13 + $0xf0] sm:$0xff]
    %v1718 = vld [vmem:[#allocation13 + $0xf8] sm:$0xff]
    %v1719 = vld [vmem:[%s12] sm:$0xf]
    %v1721 = vlaneseq
    %v1722 = vshrl.u32 %v1721, 7
    %v1723 = vsub.s32 0, %v1722
    %v1724 = vrot.slane %v1719, %v1723
    %v1725 = vlaneseq
    %v1726 = vshrl.u32 %v1725, 7
    %v1727 = vsub.s32 1, %v1726
    %v1728 = vrot.slane %v1719, %v1727
    %v1729 = vlaneseq
    %v1730 = vshrl.u32 %v1729, 7
    %v1731 = vsub.s32 2, %v1730
    %v1732 = vrot.slane %v1719, %v1731
    %v1733 = vlaneseq
    %v1734 = vshrl.u32 %v1733, 7
    %v1735 = vsub.s32 3, %v1734
    %v1736 = vrot.slane %v1719, %v1735
    %v1773 = vunpack.c.l.b16 %v1687
    %v1774 = vunpack.c.h.b16 %v1687
    %v1775 = vunpack.c.l.b16 %v1688
    %v1776 = vunpack.c.h.b16 %v1688
    %v1777 = vunpack.c.l.b16 %v1689
    %v1778 = vunpack.c.h.b16 %v1689
    %v1779 = vunpack.c.l.b16 %v1690
    %v1780 = vunpack.c.h.b16 %v1690
    %v1781 = vunpack.c.l.b16 %v1691
    %v1782 = vunpack.c.h.b16 %v1691
    %v1783 = vunpack.c.l.b16 %v1692
    %v1784 = vunpack.c.h.b16 %v1692
    %v1785 = vunpack.c.l.b16 %v1693
    %v1786 = vunpack.c.h.b16 %v1693
    %v1787 = vunpack.c.l.b16 %v1694
    %v1788 = vunpack.c.h.b16 %v1694
    %v1789 = vunpack.c.l.b16 %v1695
    %v1790 = vunpack.c.h.b16 %v1695
    %v1791 = vunpack.c.l.b16 %v1696
    %v1792 = vunpack.c.h.b16 %v1696
    %v1793 = vunpack.c.l.b16 %v1697
    %v1794 = vunpack.c.h.b16 %v1697
    %v1795 = vunpack.c.l.b16 %v1698
    %v1796 = vunpack.c.h.b16 %v1698
    %v1797 = vunpack.c.l.b16 %v1699
    %v1798 = vunpack.c.h.b16 %v1699
    %v1799 = vunpack.c.l.b16 %v1700
    %v1800 = vunpack.c.h.b16 %v1700
    %v1801 = vunpack.c.l.b16 %v1701
    %v1802 = vunpack.c.h.b16 %v1701
    %v1803 = vunpack.c.l.b16 %v1702
    %v1804 = vunpack.c.h.b16 %v1702
    %v1805 = vunpack.c.l.b16 %v1703
    %v1806 = vunpack.c.h.b16 %v1703
    %v1807 = vunpack.c.l.b16 %v1704
    %v1808 = vunpack.c.h.b16 %v1704
    %v1809 = vunpack.c.l.b16 %v1705
    %v1810 = vunpack.c.h.b16 %v1705
    %v1811 = vunpack.c.l.b16 %v1706
    %v1812 = vunpack.c.h.b16 %v1706
    %v1813 = vunpack.c.l.b16 %v1707
    %v1814 = vunpack.c.h.b16 %v1707
    %v1815 = vunpack.c.l.b16 %v1708
    %v1816 = vunpack.c.h.b16 %v1708
    %v1817 = vunpack.c.l.b16 %v1709
    %v1818 = vunpack.c.h.b16 %v1709
    %v1819 = vunpack.c.l.b16 %v1710
    %v1820 = vunpack.c.h.b16 %v1710
    %v1821 = vunpack.c.l.b16 %v1711
    %v1822 = vunpack.c.h.b16 %v1711
    %v1823 = vunpack.c.l.b16 %v1712
    %v1824 = vunpack.c.h.b16 %v1712
    %v1825 = vunpack.c.l.b16 %v1713
    %v1826 = vunpack.c.h.b16 %v1713
    %v1827 = vunpack.c.l.b16 %v1714
    %v1828 = vunpack.c.h.b16 %v1714
    %v1829 = vunpack.c.l.b16 %v1715
    %v1830 = vunpack.c.h.b16 %v1715
    %v1831 = vunpack.c.l.b16 %v1716
    %v1832 = vunpack.c.h.b16 %v1716
    %v1833 = vunpack.c.l.b16 %v1717
    %v1834 = vunpack.c.h.b16 %v1717
    %v1835 = vunpack.c.l.b16 %v1718
    %v1836 = vunpack.c.h.b16 %v1718
    %v1837 = vpack.c.b16 %v1777, %v1773
    %v1838 = vpack.c.b16 %v1778, %v1774
    %v1839 = vpack.c.b16 %v1779, %v1775
    %v1840 = vpack.c.b16 %v1780, %v1776
    %v1841 = vpack.c.b16 %v1785, %v1781
    %v1842 = vpack.c.b16 %v1786, %v1782
    %v1843 = vpack.c.b16 %v1787, %v1783
    %v1844 = vpack.c.b16 %v1788, %v1784
    %v1845 = vpack.c.b16 %v1793, %v1789
    %v1846 = vpack.c.b16 %v1794, %v1790
    %v1847 = vpack.c.b16 %v1795, %v1791
    %v1848 = vpack.c.b16 %v1796, %v1792
    %v1849 = vpack.c.b16 %v1801, %v1797
    %v1850 = vpack.c.b16 %v1802, %v1798
    %v1851 = vpack.c.b16 %v1803, %v1799
    %v1852 = vpack.c.b16 %v1804, %v1800
    %v1853 = vpack.c.b16 %v1809, %v1805
    %v1854 = vpack.c.b16 %v1810, %v1806
    %v1855 = vpack.c.b16 %v1811, %v1807
    %v1856 = vpack.c.b16 %v1812, %v1808
    %v1857 = vpack.c.b16 %v1817, %v1813
    %v1858 = vpack.c.b16 %v1818, %v1814
    %v1859 = vpack.c.b16 %v1819, %v1815
    %v1860 = vpack.c.b16 %v1820, %v1816
    %v1861 = vpack.c.b16 %v1825, %v1821
    %v1862 = vpack.c.b16 %v1826, %v1822
    %v1863 = vpack.c.b16 %v1827, %v1823
    %v1864 = vpack.c.b16 %v1828, %v1824
    %v1865 = vpack.c.b16 %v1833, %v1829
    %v1866 = vpack.c.b16 %v1834, %v1830
    %v1867 = vpack.c.b16 %v1835, %v1831
    %v1868 = vpack.c.b16 %v1836, %v1832
    %1901 = vmatprep.subr.bf16.mxu0 %v1838
    %1902 = vmatpush1.bf16.msra.mxu0 %v1837
    %1903 = vmatprep.subr.bf16.mxu0 %v1842
    %1904 = vmatpush1.bf16.msra.mxu0 %v1841
    %1905 = vmatprep.subr.bf16.mxu0 %v1846
    %1906 = vmatpush1.bf16.msra.mxu0 %v1845
    %1907 = vmatprep.subr.bf16.mxu0 %v1850
    %1908 = vmatpush1.bf16.msra.mxu0 %v1849
    %1909 = vmatprep.subr.bf16.mxu0 %v1854
    %1910 = vmatpush1.bf16.msra.mxu0 %v1853
    %1911 = vmatprep.subr.bf16.mxu0 %v1858
    %1912 = vmatpush1.bf16.msra.mxu0 %v1857
    %1913 = vmatprep.subr.bf16.mxu0 %v1862
    %1914 = vmatpush1.bf16.msra.mxu0 %v1861
    %1915 = vmatprep.subr.bf16.mxu0 %v1866
    %1916 = vmatpush1.bf16.msra.mxu0 %v1865
    %1917 = vmatprep.subr.bf16.mxu0 0
    %1918 = vmatpush1.bf16.msra.mxu0 0
    %1919 = vmatprep.subr.bf16.mxu0 0
    %1920 = vmatpush1.bf16.msra.mxu0 0
    %1921 = vmatprep.subr.bf16.mxu0 0
    %1922 = vmatpush1.bf16.msra.mxu0 0
    %1923 = vmatprep.subr.bf16.mxu0 0
    %1924 = vmatpush1.bf16.msra.mxu0 0
    %1925 = vmatprep.subr.bf16.mxu0 0
    %1926 = vmatpush1.bf16.msra.mxu0 0
    %1927 = vmatprep.subr.bf16.mxu0 0
    %1928 = vmatpush1.bf16.msra.mxu0 0
    %1929 = vmatprep.subr.bf16.mxu0 0
    %1930 = vmatpush1.bf16.msra.mxu0 0
    %1931 = vmatprep.subr.bf16.mxu0 0
    %1932 = vmatpush1.bf16.msra.mxu0 0
    %1933 = vmatprep.mubr.bf16.mxu0 0
    %1934 = vmatmul.mubr.bf16.gmra.mrb[0].mxu0 %v1685
    %v1935 = vpop.f32.mrb[0].mxu0
    %v1936 = vadd.f32 %v1724, %v1935
    %v1937 = vpop.f32.mrb[0].mxu0
    %v1938 = vadd.f32 %v1728, %v1937
    %v1939 = vpop.f32.mrb[0].mxu0
    %v1940 = vadd.f32 %v1724, %v1939
    %v1941 = vpop.f32.mrb[0].mxu0
    %v1942 = vadd.f32 %v1728, %v1941
    %1943 = vmatprep.mubr.bf16.mxu0 0
    %1944 = vmatmul.mubr.bf16.gmra.mrb[0].mxu0 %v1686
    %v1945 = vpop.f32.mrb[0].mxu0
    %v1946 = vadd.f32 %v1724, %v1945
    %v1947 = vpop.f32.mrb[0].mxu0
    %v1948 = vadd.f32 %v1728, %v1947
    %v1949 = vpop.f32.mrb[0].mxu0
    %v1950 = vadd.f32 %v1724, %v1949
    %v1951 = vpop.f32.mrb[0].mxu0
    %v1952 = vadd.f32 %v1728, %v1951
    %1953 = vdwg.mxu0
    %1954 = vmatprep.subr.bf16.mxu0 %v1840
    %1955 = vmatpush1.bf16.msra.mxu0 %v1839
    %1956 = vmatprep.subr.bf16.mxu0 %v1844
    %1957 = vmatpush1.bf16.msra.mxu0 %v1843
    %1958 = vmatprep.subr.bf16.mxu0 %v1848
    %1959 = vmatpush1.bf16.msra.mxu0 %v1847
    %1960 = vmatprep.subr.bf16.mxu0 %v1852
    %1961 = vmatpush1.bf16.msra.mxu0 %v1851
    %1962 = vmatprep.subr.bf16.mxu0 %v1856
    %1963 = vmatpush1.bf16.msra.mxu0 %v1855
    %1964 = vmatprep.subr.bf16.mxu0 %v1860
    %1965 = vmatpush1.bf16.msra.mxu0 %v1859
    %1966 = vmatprep.subr.bf16.mxu0 %v1864
    %1967 = vmatpush1.bf16.msra.mxu0 %v1863
    %1968 = vmatprep.subr.bf16.mxu0 %v1868
    %1969 = vmatpush1.bf16.msra.mxu0 %v1867
    %1970 = vmatprep.subr.bf16.mxu0 0
    %1971 = vmatpush1.bf16.msra.mxu0 0
    %1972 = vmatprep.subr.bf16.mxu0 0
    %1973 = vmatpush1.bf16.msra.mxu0 0
    %1974 = vmatprep.subr.bf16.mxu0 0
    %1975 = vmatpush1.bf16.msra.mxu0 0
    %1976 = vmatprep.subr.bf16.mxu0 0
    %1977 = vmatpush1.bf16.msra.mxu0 0
    %1978 = vmatprep.subr.bf16.mxu0 0
    %1979 = vmatpush1.bf16.msra.mxu0 0
    %1980 = vmatprep.subr.bf16.mxu0 0
    %1981 = vmatpush1.bf16.msra.mxu0 0
    %1982 = vmatprep.subr.bf16.mxu0 0
    %1983 = vmatpush1.bf16.msra.mxu0 0
    %1984 = vmatprep.subr.bf16.mxu0 0
    %1985 = vmatpush1.bf16.msra.mxu0 0
    %1986 = vmatprep.mubr.bf16.mxu0 0
    %1987 = vmatmul.mubr.bf16.gmra.mrb[0].mxu0 %v1685
    %v1988 = vpop.f32.mrb[0].mxu0
    %v1989 = vadd.f32 %v1732, %v1988
    %v1990 = vpop.f32.mrb[0].mxu0
    %v1991 = vadd.f32 %v1736, %v1990
    %v1992 = vpop.f32.mrb[0].mxu0
    %v1993 = vadd.f32 %v1732, %v1992
    %v1994 = vpop.f32.mrb[0].mxu0
    %v1995 = vadd.f32 %v1736, %v1994
    %1996 = vmatprep.mubr.bf16.mxu0 0
    %1997 = vmatmul.mubr.bf16.gmra.mrb[0].mxu0 %v1686
    %v1998 = vpop.f32.mrb[0].mxu0
    %v1999 = vadd.f32 %v1732, %v1998
    %v2000 = vpop.f32.mrb[0].mxu0
    %v2001 = vadd.f32 %v1736, %v2000
    %v2002 = vpop.f32.mrb[0].mxu0
    %v2003 = vadd.f32 %v1732, %v2002
    %v2004 = vpop.f32.mrb[0].mxu0
    %v2005 = vadd.f32 %v1736, %v2004
    %2006 = vdwg.mxu0
    %v2007 = vmax.f32 %v1936, 0.0
    %v2008 = vmax.f32 %v1938, 0.0
    %v2009 = vmax.f32 %v1989, 0.0
    %v2010 = vmax.f32 %v1991, 0.0
    %v2011 = vmax.f32 %v1940, 0.0
    %v2012 = vmax.f32 %v1942, 0.0
    %v2013 = vmax.f32 %v1993, 0.0
    %v2014 = vmax.f32 %v1995, 0.0
    %v2015 = vmax.f32 %v1946, 0.0
    %v2016 = vmax.f32 %v1948, 0.0
    %v2017 = vmax.f32 %v1999, 0.0
    %v2018 = vmax.f32 %v2001, 0.0
    %v2019 = vmax.f32 %v1950, 0.0
    %v2020 = vmax.f32 %v1952, 0.0
    %v2021 = vmax.f32 %v2003, 0.0
    %v2022 = vmax.f32 %v2005, 0.0
    %v2023 = vpack.c.bf16 %v2011, %v2007
    %v2024 = vpack.c.bf16 %v2012, %v2008
    %v2025 = vpack.c.bf16 %v2013, %v2009
    %v2026 = vpack.c.bf16 %v2014, %v2010
    %v2027 = vpack.c.bf16 %v2019, %v2015
    %v2028 = vpack.c.bf16 %v2020, %v2016
    %v2029 = vpack.c.bf16 %v2021, %v2017
    %v2030 = vpack.c.bf16 %v2022, %v2018
    %v2031 = vld [vmem:[#allocation14] sm:$0xf]
    %v2032 = vld [vmem:[#allocation14 + $0x4] sm:$0xf]
    %v2033 = vld [vmem:[#allocation14 + $0x8] sm:$0xf]
    %v2034 = vld [vmem:[#allocation14 + $0xc] sm:$0xf]
    %v2035 = vld [vmem:[#allocation14 + $0x10] sm:$0xf]
    %v2036 = vld [vmem:[#allocation14 + $0x14] sm:$0xf]
    %v2037 = vld [vmem:[#allocation14 + $0x18] sm:$0xf]
    %v2038 = vld [vmem:[#allocation14 + $0x1c] sm:$0xf]
    %v2039 = vld [vmem:[#allocation14 + $0x20] sm:$0xf]
    %v2040 = vld [vmem:[#allocation14 + $0x24] sm:$0xf]
    %v2041 = vld [vmem:[#allocation14 + $0x28] sm:$0xf]
    %v2042 = vld [vmem:[#allocation14 + $0x2c] sm:$0xf]
    %v2043 = vld [vmem:[#allocation14 + $0x30] sm:$0xf]
    %v2044 = vld [vmem:[#allocation14 + $0x34] sm:$0xf]
    %v2045 = vld [vmem:[#allocation14 + $0x38] sm:$0xf]
    %v2046 = vld [vmem:[#allocation14 + $0x3c] sm:$0xf]
    %v2047 = vld [vmem:[#allocation14 + $0x40] sm:$0xf]
    %v2048 = vld [vmem:[#allocation14 + $0x44] sm:$0xf]
    %v2049 = vld [vmem:[#allocation14 + $0x48] sm:$0xf]
    %v2050 = vld [vmem:[#allocation14 + $0x4c] sm:$0xf]
    %v2051 = vld [vmem:[#allocation14 + $0x50] sm:$0xf]
    %v2052 = vld [vmem:[#allocation14 + $0x54] sm:$0xf]
    %v2053 = vld [vmem:[#allocation14 + $0x58] sm:$0xf]
    %v2054 = vld [vmem:[#allocation14 + $0x5c] sm:$0xf]
    %v2055 = vld [vmem:[#allocation14 + $0x60] sm:$0xf]
    %v2056 = vld [vmem:[#allocation14 + $0x64] sm:$0xf]
    %v2057 = vld [vmem:[#allocation14 + $0x68] sm:$0xf]
    %v2058 = vld [vmem:[#allocation14 + $0x6c] sm:$0xf]
    %v2059 = vld [vmem:[#allocation14 + $0x70] sm:$0xf]
    %v2060 = vld [vmem:[#allocation14 + $0x74] sm:$0xf]
    %v2061 = vld [vmem:[#allocation14 + $0x78] sm:$0xf]
    %v2062 = vld [vmem:[#allocation14 + $0x7c] sm:$0xf]
    %v2063 = vld [vmem:[#allocation14 + $0x80] sm:$0xf]
    %v2064 = vld [vmem:[#allocation14 + $0x84] sm:$0xf]
    %v2065 = vld [vmem:[#allocation14 + $0x88] sm:$0xf]
    %v2066 = vld [vmem:[#allocation14 + $0x8c] sm:$0xf]
    %v2067 = vld [vmem:[#allocation14 + $0x90] sm:$0xf]
    %v2068 = vld [vmem:[#allocation14 + $0x94] sm:$0xf]
    %v2069 = vld [vmem:[#allocation14 + $0x98] sm:$0xf]
    %v2070 = vld [vmem:[#allocation14 + $0x9c] sm:$0xf]
    %v2071 = vld [vmem:[#allocation14 + $0xa0] sm:$0xf]
    %v2072 = vld [vmem:[#allocation14 + $0xa4] sm:$0xf]
    %v2073 = vld [vmem:[#allocation14 + $0xa8] sm:$0xf]
    %v2074 = vld [vmem:[#allocation14 + $0xac] sm:$0xf]
    %v2075 = vld [vmem:[#allocation14 + $0xb0] sm:$0xf]
    %v2076 = vld [vmem:[#allocation14 + $0xb4] sm:$0xf]
    %v2077 = vld [vmem:[#allocation14 + $0xb8] sm:$0xf]
    %v2078 = vld [vmem:[#allocation14 + $0xbc] sm:$0xf]
    %v2079 = vld [vmem:[#allocation14 + $0xc0] sm:$0xf]
    %v2080 = vld [vmem:[#allocation14 + $0xc4] sm:$0xf]
    %v2081 = vld [vmem:[#allocation14 + $0xc8] sm:$0xf]
    %v2082 = vld [vmem:[#allocation14 + $0xcc] sm:$0xf]
    %v2083 = vld [vmem:[#allocation14 + $0xd0] sm:$0xf]
    %v2084 = vld [vmem:[#allocation14 + $0xd4] sm:$0xf]
    %v2085 = vld [vmem:[#allocation14 + $0xd8] sm:$0xf]
    %v2086 = vld [vmem:[#allocation14 + $0xdc] sm:$0xf]
    %v2087 = vld [vmem:[#allocation14 + $0xe0] sm:$0xf]
    %v2088 = vld [vmem:[#allocation14 + $0xe4] sm:$0xf]
    %v2089 = vld [vmem:[#allocation14 + $0xe8] sm:$0xf]
    %v2090 = vld [vmem:[#allocation14 + $0xec] sm:$0xf]
    %v2091 = vld [vmem:[#allocation14 + $0xf0] sm:$0xf]
    %v2092 = vld [vmem:[#allocation14 + $0xf4] sm:$0xf]
    %v2093 = vld [vmem:[#allocation14 + $0xf8] sm:$0xf]
    %v2094 = vld [vmem:[#allocation14 + $0xfc] sm:$0xf]
    %v2095 = vld [vmem:[%s14] sm:$0x1]
    %v2097 = vlaneseq
    %v2098 = vshrl.u32 %v2097, 7
    %v2099 = vsub.s32 0, %v2098
    %v2100 = vrot.slane %v2095, %v2099
    %v2166 = vunpack.c.l.b16 %v2031
    %v2167 = vunpack.c.l.b16 %v2032
    %v2168 = vunpack.c.l.b16 %v2033
    %v2169 = vunpack.c.l.b16 %v2034
    %v2170 = vunpack.c.l.b16 %v2035
    %v2171 = vunpack.c.l.b16 %v2036
    %v2172 = vunpack.c.l.b16 %v2037
    %v2173 = vunpack.c.l.b16 %v2038
    %v2174 = vunpack.c.l.b16 %v2039
    %v2175 = vunpack.c.l.b16 %v2040
    %v2176 = vunpack.c.l.b16 %v2041
    %v2177 = vunpack.c.l.b16 %v2042
    %v2178 = vunpack.c.l.b16 %v2043
    %v2179 = vunpack.c.l.b16 %v2044
    %v2180 = vunpack.c.l.b16 %v2045
    %v2181 = vunpack.c.l.b16 %v2046
    %v2182 = vunpack.c.l.b16 %v2047
    %v2183 = vunpack.c.l.b16 %v2048
    %v2184 = vunpack.c.l.b16 %v2049
    %v2185 = vunpack.c.l.b16 %v2050
    %v2186 = vunpack.c.l.b16 %v2051
    %v2187 = vunpack.c.l.b16 %v2052
    %v2188 = vunpack.c.l.b16 %v2053
    %v2189 = vunpack.c.l.b16 %v2054
    %v2190 = vunpack.c.l.b16 %v2055
    %v2191 = vunpack.c.l.b16 %v2056
    %v2192 = vunpack.c.l.b16 %v2057
    %v2193 = vunpack.c.l.b16 %v2058
    %v2194 = vunpack.c.l.b16 %v2059
    %v2195 = vunpack.c.l.b16 %v2060
    %v2196 = vunpack.c.l.b16 %v2061
    %v2197 = vunpack.c.l.b16 %v2062
    %v2198 = vunpack.c.l.b16 %v2063
    %v2199 = vunpack.c.l.b16 %v2064
    %v2200 = vunpack.c.l.b16 %v2065
    %v2201 = vunpack.c.l.b16 %v2066
    %v2202 = vunpack.c.l.b16 %v2067
    %v2203 = vunpack.c.l.b16 %v2068
    %v2204 = vunpack.c.l.b16 %v2069
    %v2205 = vunpack.c.l.b16 %v2070
    %v2206 = vunpack.c.l.b16 %v2071
    %v2207 = vunpack.c.l.b16 %v2072
    %v2208 = vunpack.c.l.b16 %v2073
    %v2209 = vunpack.c.l.b16 %v2074
    %v2210 = vunpack.c.l.b16 %v2075
    %v2211 = vunpack.c.l.b16 %v2076
    %v2212 = vunpack.c.l.b16 %v2077
    %v2213 = vunpack.c.l.b16 %v2078
    %v2214 = vunpack.c.l.b16 %v2079
    %v2215 = vunpack.c.l.b16 %v2080
    %v2216 = vunpack.c.l.b16 %v2081
    %v2217 = vunpack.c.l.b16 %v2082
    %v2218 = vunpack.c.l.b16 %v2083
    %v2219 = vunpack.c.l.b16 %v2084
    %v2220 = vunpack.c.l.b16 %v2085
    %v2221 = vunpack.c.l.b16 %v2086
    %v2222 = vunpack.c.l.b16 %v2087
    %v2223 = vunpack.c.l.b16 %v2088
    %v2224 = vunpack.c.l.b16 %v2089
    %v2225 = vunpack.c.l.b16 %v2090
    %v2226 = vunpack.c.l.b16 %v2091
    %v2227 = vunpack.c.l.b16 %v2092
    %v2228 = vunpack.c.l.b16 %v2093
    %v2229 = vunpack.c.l.b16 %v2094
    %v2230 = vpack.c.b16 %v2167, %v2166
    %v2231 = vpack.c.b16 %v2169, %v2168
    %v2232 = vpack.c.b16 %v2171, %v2170
    %v2233 = vpack.c.b16 %v2173, %v2172
    %v2234 = vpack.c.b16 %v2175, %v2174
    %v2235 = vpack.c.b16 %v2177, %v2176
    %v2236 = vpack.c.b16 %v2179, %v2178
    %v2237 = vpack.c.b16 %v2181, %v2180
    %v2238 = vpack.c.b16 %v2183, %v2182
    %v2239 = vpack.c.b16 %v2185, %v2184
    %v2240 = vpack.c.b16 %v2187, %v2186
    %v2241 = vpack.c.b16 %v2189, %v2188
    %v2242 = vpack.c.b16 %v2191, %v2190
    %v2243 = vpack.c.b16 %v2193, %v2192
    %v2244 = vpack.c.b16 %v2195, %v2194
    %v2245 = vpack.c.b16 %v2197, %v2196
    %v2246 = vpack.c.b16 %v2199, %v2198
    %v2247 = vpack.c.b16 %v2201, %v2200
    %v2248 = vpack.c.b16 %v2203, %v2202
    %v2249 = vpack.c.b16 %v2205, %v2204
    %v2250 = vpack.c.b16 %v2207, %v2206
    %v2251 = vpack.c.b16 %v2209, %v2208
    %v2252 = vpack.c.b16 %v2211, %v2210
    %v2253 = vpack.c.b16 %v2213, %v2212
    %v2254 = vpack.c.b16 %v2215, %v2214
    %v2255 = vpack.c.b16 %v2217, %v2216
    %v2256 = vpack.c.b16 %v2219, %v2218
    %v2257 = vpack.c.b16 %v2221, %v2220
    %v2258 = vpack.c.b16 %v2223, %v2222
    %v2259 = vpack.c.b16 %v2225, %v2224
    %v2260 = vpack.c.b16 %v2227, %v2226
    %v2261 = vpack.c.b16 %v2229, %v2228
    %2294 = vmatprep.subr.bf16.mxu0 0
    %2295 = vmatpush1.bf16.msra.mxu0 %v2230
    %2296 = vmatprep.subr.bf16.mxu0 0
    %2297 = vmatpush1.bf16.msra.mxu0 %v2231
    %2298 = vmatprep.subr.bf16.mxu0 0
    %2299 = vmatpush1.bf16.msra.mxu0 %v2232
    %2300 = vmatprep.subr.bf16.mxu0 0
    %2301 = vmatpush1.bf16.msra.mxu0 %v2233
    %2302 = vmatprep.subr.bf16.mxu0 0
    %2303 = vmatpush1.bf16.msra.mxu0 %v2234
    %2304 = vmatprep.subr.bf16.mxu0 0
    %2305 = vmatpush1.bf16.msra.mxu0 %v2235
    %2306 = vmatprep.subr.bf16.mxu0 0
    %2307 = vmatpush1.bf16.msra.mxu0 %v2236
    %2308 = vmatprep.subr.bf16.mxu0 0
    %2309 = vmatpush1.bf16.msra.mxu0 %v2237
    %2310 = vmatprep.subr.bf16.mxu0 0
    %2311 = vmatpush1.bf16.msra.mxu0 %v2238
    %2312 = vmatprep.subr.bf16.mxu0 0
    %2313 = vmatpush1.bf16.msra.mxu0 %v2239
    %2314 = vmatprep.subr.bf16.mxu0 0
    %2315 = vmatpush1.bf16.msra.mxu0 %v2240
    %2316 = vmatprep.subr.bf16.mxu0 0
    %2317 = vmatpush1.bf16.msra.mxu0 %v2241
    %2318 = vmatprep.subr.bf16.mxu0 0
    %2319 = vmatpush1.bf16.msra.mxu0 %v2242
    %2320 = vmatprep.subr.bf16.mxu0 0
    %2321 = vmatpush1.bf16.msra.mxu0 %v2243
    %2322 = vmatprep.subr.bf16.mxu0 0
    %2323 = vmatpush1.bf16.msra.mxu0 %v2244
    %2324 = vmatprep.subr.bf16.mxu0 0
    %2325 = vmatpush1.bf16.msra.mxu0 %v2245
    %2326 = vmatprep.mubr.bf16.mxu0 %v2024
    %2327 = vmatmul.mubr.bf16.gmra.mrb[0].mxu0 %v2023
    %v2328 = vpop.f32.mrb[0].mxu0
    %v2329 = vadd.f32 %v2100, %v2328
    %v2330 = vpop.f32.mrb[0].mxu0
    %v2331 = vpop.f32.mrb[0].mxu0
    %v2332 = vadd.f32 %v2100, %v2331
    %v2333 = vpop.f32.mrb[0].mxu0
    %2334 = vmatprep.mubr.bf16.mxu0 %v2028
    %2335 = vmatmul.mubr.bf16.gmra.mrb[0].mxu0 %v2027
    %v2336 = vpop.f32.mrb[0].mxu0
    %v2337 = vadd.f32 %v2100, %v2336
    %v2338 = vpop.f32.mrb[0].mxu0
    %v2339 = vpop.f32.mrb[0].mxu0
    %v2340 = vadd.f32 %v2100, %v2339
    %v2341 = vpop.f32.mrb[0].mxu0
    %2342 = vdwg.mxu0
    %2343 = vmatprep.subr.bf16.mxu0 0
    %2344 = vmatpush1.bf16.msra.mxu0 %v2246
    %2345 = vmatprep.subr.bf16.mxu0 0
    %2346 = vmatpush1.bf16.msra.mxu0 %v2247
    %2347 = vmatprep.subr.bf16.mxu0 0
    %2348 = vmatpush1.bf16.msra.mxu0 %v2248
    %2349 = vmatprep.subr.bf16.mxu0 0
    %2350 = vmatpush1.bf16.msra.mxu0 %v2249
    %2351 = vmatprep.subr.bf16.mxu0 0
    %2352 = vmatpush1.bf16.msra.mxu0 %v2250
    %2353 = vmatprep.subr.bf16.mxu0 0
    %2354 = vmatpush1.bf16.msra.mxu0 %v2251
    %2355 = vmatprep.subr.bf16.mxu0 0
    %2356 = vmatpush1.bf16.msra.mxu0 %v2252
    %2357 = vmatprep.subr.bf16.mxu0 0
    %2358 = vmatpush1.bf16.msra.mxu0 %v2253
    %2359 = vmatprep.subr.bf16.mxu0 0
    %2360 = vmatpush1.bf16.msra.mxu0 %v2254
    %2361 = vmatprep.subr.bf16.mxu0 0
    %2362 = vmatpush1.bf16.msra.mxu0 %v2255
    %2363 = vmatprep.subr.bf16.mxu0 0
    %2364 = vmatpush1.bf16.msra.mxu0 %v2256
    %2365 = vmatprep.subr.bf16.mxu0 0
    %2366 = vmatpush1.bf16.msra.mxu0 %v2257
    %2367 = vmatprep.subr.bf16.mxu0 0
    %2368 = vmatpush1.bf16.msra.mxu0 %v2258
    %2369 = vmatprep.subr.bf16.mxu0 0
    %2370 = vmatpush1.bf16.msra.mxu0 %v2259
    %2371 = vmatprep.subr.bf16.mxu0 0
    %2372 = vmatpush1.bf16.msra.mxu0 %v2260
    %2373 = vmatprep.subr.bf16.mxu0 0
    %2374 = vmatpush1.bf16.msra.mxu0 %v2261
    %2375 = vmatprep.mubr.bf16.mxu0 %v2026
    %2376 = vmatmul.mubr.bf16.gmra.mrb[0].mxu0 %v2025
    %v2377 = vpop.f32.mrb[0].mxu0
    %v2378 = vadd.f32 %v2329, %v2377
    %v2379 = vpop.f32.mrb[0].mxu0
    %v2380 = vpop.f32.mrb[0].mxu0
    %v2381 = vadd.f32 %v2332, %v2380
    %v2382 = vpop.f32.mrb[0].mxu0
    %2383 = vmatprep.mubr.bf16.mxu0 %v2030
    %2384 = vmatmul.mubr.bf16.gmra.mrb[0].mxu0 %v2029
    %v2385 = vpop.f32.mrb[0].mxu0
    %v2386 = vadd.f32 %v2337, %v2385
    %v2387 = vpop.f32.mrb[0].mxu0
    %v2388 = vpop.f32.mrb[0].mxu0
    %v2389 = vadd.f32 %v2340, %v2388
    %v2390 = vpop.f32.mrb[0].mxu0
    %2391 = vdwg.mxu0
    %v2392 = vadd.f32 %v1615, %v2378
    %v2393 = vadd.f32 %v1616, %v2381
    %v2394 = vadd.f32 %v1617, %v2386
    %v2395 = vadd.f32 %v1618, %v2389
    %2396 = vst [vmem:[#allocation16] sm:$0xff] %v2392
    %2397 = vst [vmem:[#allocation16 + $0x8] sm:$0xff] %v2393
    %2398 = vst [vmem:[#allocation16 + $0x10] sm:$0xff] %v2394
    %2399 = vst [vmem:[#allocation16 + $0x18] sm:$0xff] %v2395
    // Predicated region
    $region94: #{tpu_custom_call.1} parent=1 // pred_check
      _
    $region95: #{tpu_custom_call.1} parent=1 // pred_check_branch
      %2401 = sbr.rel (0) target = $region97
    $region96: #{tpu_custom_call.1} parent=1 // pred_region
      %s2403 = ssub.s32 512, 512
      %2404 = vsyncadd [#allocation4], %s2403
      %s2405 = sshll.u32 [#allocation16], 4
      %s2406 = int_to_ptr.vmem [resolvable:$true] %s2405
      %2411 = dma.vmem_to_hbm [thread:$0]  %s2406, 512, %s15, [#allocation4], 128, 128, 8
    $region97: #{tpu_custom_call.1} parent=1 // pred_fallthru
      _
    // Predicated region
    $region98: #{tpu_custom_call.1} parent=1 // pred_check
      _
    $region99: #{tpu_custom_call.1} parent=1 // pred_check_branch
      %2413 = sbr.rel (0) target = $region101
    $region100: #{tpu_custom_call.1} parent=1 // pred_region
      %2414 = dma.done [#allocation4], 512
    $region101: #{tpu_custom_call.1} parent=1 // pred_fallthru
      _
    %2415 = vsyncpa [#allocation3], 1
    %2416 = vsyncpa [#allocation6], 1
    %2417 = vsyncpa [#allocation9], 1
    %2418 = vsyncpa [#allocation12], 1
    %2419 = vsyncpa [#allocation15], 1
    %2420 = vsyncpa [#allocation4], 1

</llo_original>
